<compile_context>
chip_gen: v5e
topology: v5e:2x2
jax: 0.10.0
libtpu: 0.0.40
codegen_flags: <defaults>
</compile_context>

<pallas_src>
import math
import functools

import jax
import jax.numpy as jnp
from jax.experimental import pallas as pl
from jax.experimental.pallas import tpu as pltpu

HIDDEN = 32          # d_model of the synthetic encoder
FFN = 4 * HIDDEN     # T5 FFN expansion
QKV_PAD = 128        # fused q|k|v weight padded to a full lane width
EPS = 1e-6
NEG_INF = -1e30


def _round_up(n, m):
    return ((n + m - 1) // m) * m


# ----------------------------------------------------------------------------
# Pallas kernel: the whole Chronos hot path for a block of TB series.
# ----------------------------------------------------------------------------
def chronos_kernel(x_ref, w_in_ref, wqkv_ref, wo_ref, g1_ref, w1_ref, w2_ref,
                   g2_ref, w_emb_ref, w_fc_ref, emb_ref, fc_ref, *, seq_valid):
    x = x_ref[...].astype(jnp.float32)                          # (TB, Lp)
    tb, lp = x.shape

    # --- tokenizer-style mean-scale normalization (per series reduction) ----
    # Padded time positions are zero, so summing over Lp and dividing by the
    # true length gives the exact mean |x|.  Exact division (not the approx
    # reciprocal) so the scale matches the reference MeanScale tokenizer.
    scale = jnp.sum(jnp.abs(x), axis=1, keepdims=True) * (1.0 / seq_valid) + EPS
    xn = x / scale                                              # (TB, Lp)

    # --- value -> hidden projection -----------------------------------------
    w_in = w_in_ref[...]                                        # (1, H) f32
    h3 = xn[:, :, None] * w_in[None, :, :]                      # (TB, Lp, H)
    h2 = h3.reshape(tb * lp, HIDDEN)                            # (TB*Lp, H)

    def rmsnorm2d(t, g_ref):
        var = jnp.mean(t * t, axis=-1, keepdims=True)
        return t * jax.lax.rsqrt(var + EPS) * g_ref[...]        # g: (1, H)

    # --- T5-style self-attention (pre-norm, no biases) ----------------------
    # Fused QKV: one lane-dense (H, 128) weight, bf16 operands, f32 accum.
    hn = rmsnorm2d(h2, g1_ref)
    qkv = jnp.dot(hn.astype(jnp.bfloat16), wqkv_ref[...],
                  preferred_element_type=jnp.float32)           # (TB*Lp, 128)
    q3 = qkv[:, 0:HIDDEN].reshape(tb, lp, HIDDEN)
    k3 = qkv[:, HIDDEN:2 * HIDDEN].reshape(tb, lp, HIDDEN)
    v3 = qkv[:, 2 * HIDDEN:3 * HIDDEN].reshape(tb, lp, HIDDEN)

    scores = jnp.einsum('blk,bmk->blm',
                        q3.astype(jnp.bfloat16), k3.astype(jnp.bfloat16),
                        preferred_element_type=jnp.float32)     # (TB, Lq, Lk)
    scores = scores * (1.0 / math.sqrt(HIDDEN))

    # Mask padded key positions so the softmax is exact w.r.t. the unpadded
    # sequence (bidirectional T5 encoder: no causal mask).
    key_valid = jax.lax.broadcasted_iota(jnp.int32, (1, 1, lp), 2) < seq_valid
    scores = jnp.where(key_valid, scores, NEG_INF)

    m = jnp.max(scores, axis=-1, keepdims=True)
    e = jnp.exp(scores - m)
    p = e * pl.reciprocal(jnp.sum(e, axis=-1, keepdims=True), approx=True)

    attn3 = jnp.einsum('blm,bmk->blk',
                       p.astype(jnp.bfloat16), v3.astype(jnp.bfloat16),
                       preferred_element_type=jnp.float32)      # (TB, Lp, H)
    attn2 = attn3.reshape(tb * lp, HIDDEN)
    h2 = h2 + jnp.dot(attn2.astype(jnp.bfloat16), wo_ref[...],
                      preferred_element_type=jnp.float32)

    # --- FFN block -----------------------------------------------------------
    hn2 = rmsnorm2d(h2, g2_ref)
    ff = jnp.dot(hn2.astype(jnp.bfloat16), w1_ref[...],
                 preferred_element_type=jnp.float32)
    ff = jnp.maximum(ff, 0.0)
    h2 = h2 + jnp.dot(ff.astype(jnp.bfloat16), w2_ref[...],
                      preferred_element_type=jnp.float32)

    h3 = h2.reshape(tb, lp, HIDDEN)                             # (TB, Lp, H)

    # --- embedding head: per-token scalar, preserves (TB, Lp) ---------------
    w_emb = w_emb_ref[...]                                      # (1, H) f32
    emb_ref[...] = jnp.sum(h3 * w_emb[None, :, :], axis=-1)     # (TB, Lp)

    # --- forecasting head: pooled hidden -> P steps (padded to 128 lanes) ---
    tok_valid = (jax.lax.broadcasted_iota(jnp.int32, (1, lp, 1), 1)
                 < seq_valid).astype(jnp.float32)
    pooled = jnp.sum(h3 * tok_valid, axis=1) * (1.0 / seq_valid)  # (TB, H)
    fc = jnp.dot(pooled.astype(jnp.bfloat16), w_fc_ref[...],
                 preferred_element_type=jnp.float32)            # (TB, Ppad)
    fc_ref[...] = fc * scale                                    # exact rescale


# ----------------------------------------------------------------------------
# Chip-aware sizing helpers.
# ----------------------------------------------------------------------------
def _tpu_info():
    """(vmem_capacity_bytes, num_tensorcores) with safe fallbacks."""
    capacity = 128 << 20   # v5e / v6e physical VMEM per TensorCore
    ncores = 1             # v5e / v6e have one TensorCore per chip
    try:
        info = pltpu.get_tpu_info()
        capacity = int(getattr(info, "vmem_capacity_bytes", capacity)
                       or capacity)
        for attr in ("num_tensorcores", "tensorcores_per_chip",
                     "num_cores", "cores_per_chip"):
            n = getattr(info, attr, None)
            if n:
                ncores = int(n)
                break
    except Exception:
        pass
    return capacity, ncores


def _tile_footprint_bytes(tb, lp, ppad):
    """Approximate live VMEM for one grid step (compute + pipelined I/O)."""
    f32, bf16 = 4, 2
    scores = 3 * tb * lp * lp * f32            # scores / exp / probs together
    hid = 8 * tb * lp * HIDDEN * f32           # h2, hn, qkv, attn, ffn-out, ...
    hid += 4 * tb * lp * HIDDEN * bf16         # bf16 copies fed to the MXU
    ffn = tb * lp * FFN * (f32 + bf16)         # relu output + bf16 copy
    io = 2 * (2 * tb * lp * f32) + 2 * tb * ppad * f32   # double-buffered tiles
    weights = (HIDDEN * QKV_PAD + HIDDEN * HIDDEN + 2 * HIDDEN * FFN
               + HIDDEN * ppad + 4 * HIDDEN) * f32
    return scores + hid + ffn + io + weights


def _choose_tb_max(lp, ppad, budget_bytes, tb_cap=64):
    for cand in range(tb_cap, 7, -8):
        if _tile_footprint_bytes(cand, lp, ppad) <= budget_bytes:
            return cand
    return 8


# ----------------------------------------------------------------------------
# Wrapper: runs the kernel over the channel-independent (BD, L) slab.
# ----------------------------------------------------------------------------
def chronos_apply_2d(x2d, params, prediction_length):
    bd, seq_len = x2d.shape

    # Time axis: only round up to 128 for long (already ~aligned) contexts;
    # short contexts pad to a multiple of 8 to avoid blowing up the
    # (TB, Lq, Lk) score/exp tensors and the FFN by up to 64x.
    lp = _round_up(seq_len, 128) if seq_len >= 128 else _round_up(seq_len, 8)
    ppad = _round_up(max(prediction_length, 1), 128)

    capacity, ncores = _tpu_info()
    budget = min(capacity // 4, 32 << 20)      # 32 MiB on v5e/v6e, 16 MiB v7x
    tb_max = _choose_tb_max(lp, ppad, budget)

    # Steps-first tiling: balanced across TensorCores, minimal row padding.
    bd_r = _round_up(bd, 8)
    steps = max(pl.cdiv(bd_r, tb_max), 1)
    if ncores > 1:
        steps = _round_up(max(steps, ncores), ncores)
    tb = min(_round_up(pl.cdiv(bd_r, steps), 8), tb_max)
    bd_pad = _round_up(bd_r, tb)

    footprint = _tile_footprint_bytes(tb, lp, ppad)
    vmem_limit = int(min(int(capacity * 0.45),
                         max(int(footprint * 1.5), 32 << 20)))

    x_p = jnp.pad(x2d, ((0, bd_pad - bd), (0, lp - seq_len)))

    # Fused QKV weight, lane-padded to 128; MXU weights cast to bf16 once.
    w_qkv = jnp.concatenate([params['wq'], params['wk'], params['wv']], axis=1)
    w_qkv = jnp.pad(w_qkv, ((0, 0), (0, QKV_PAD - w_qkv.shape[1])))
    w_qkv = w_qkv.astype(jnp.bfloat16)
    w_fc = jnp.pad(params['w_fc'],
                   ((0, 0), (0, ppad - params['w_fc'].shape[1])))
    w_fc = w_fc.astype(jnp.bfloat16)
    wo = params['wo'].astype(jnp.bfloat16)
    w1 = params['w1'].astype(jnp.bfloat16)
    w2 = params['w2'].astype(jnp.bfloat16)

    w_args = [params['w_in'], w_qkv, wo, params['g1'], w1, w2,
              params['g2'], params['w_emb'], w_fc]

    # Constant-index BlockSpecs: weight blocks are DMA'd once and stay
    # resident across the (parallel) grid.
    full = lambda arr: pl.BlockSpec(arr.shape, lambda i: (0, 0))

    kernel = functools.partial(chronos_kernel, seq_valid=seq_len)

    emb, fc = pl.pallas_call(
        kernel,
        out_shape=(jax.ShapeDtypeStruct((bd_pad, lp), jnp.float32),
                   jax.ShapeDtypeStruct((bd_pad, ppad), jnp.float32)),
        grid=(bd_pad // tb,),
        in_specs=[pl.BlockSpec((tb, lp), lambda i: (i, 0))]
                 + [full(w) for w in w_args],
        out_specs=(pl.BlockSpec((tb, lp), lambda i: (i, 0)),
                   pl.BlockSpec((tb, ppad), lambda i: (i, 0))),
        compiler_params=pltpu.CompilerParams(
            dimension_semantics=("parallel",),
            vmem_limit_bytes=vmem_limit),
    )(x_p, *w_args)

    return emb[:bd, :seq_len], fc[:bd, :prediction_length]


# ----------------------------------------------------------------------------
# Chronos module forward (embedding / forecasting), channel-independent glue.
# ----------------------------------------------------------------------------
def chronos_forward(x, params, task, out_seq_len, num_samples=1):
    """x: (batch, seq_len, n_features) -> see original forward() docstring."""
    b, l, d = x.shape
    x2 = jnp.transpose(x, (0, 2, 1)).reshape(b * d, l)          # (bd, l)
    emb2, fc2 = chronos_apply_2d(x2, params, out_seq_len)

    if task == 'embedding':
        emb3 = jnp.transpose(emb2.reshape(b, d, l), (0, 2, 1))  # (b, l, d)
        return emb3[:, :-out_seq_len, :]
    elif task == 'forecasting':
        # TODO(synk): original Chronos draws `num_samples` stochastic decodes
        # (temperature/top_k/top_p) and averages them; here the decode is
        # deterministic so the mean over samples is the identity.
        fc3 = jnp.transpose(fc2.reshape(b, d, out_seq_len), (0, 2, 1))
        return fc3                                              # (b, out_seq_len, d)
    else:
        raise ValueError(f'Unknown task: {task}')


# ----------------------------------------------------------------------------
# Deterministic synthetic parameters (shapes implied by the encoder above).
# ----------------------------------------------------------------------------
def init_params(key, hidden=HIDDEN, ffn=FFN, prediction_length=4):
    ks = jax.random.split(key, 9)
    s = 0.05
    return {
        'w_in':  s * jax.random.normal(ks[0], (1, hidden), jnp.float32),
        'wq':    s * jax.random.normal(ks[1], (hidden, hidden), jnp.float32),
        'wk':    s * jax.random.normal(ks[2], (hidden, hidden), jnp.float32),
        'wv':    s * jax.random.normal(ks[3], (hidden, hidden), jnp.float32),
        'wo':    s * jax.random.normal(ks[4], (hidden, hidden), jnp.float32),
        'g1':    jnp.ones((1, hidden), jnp.float32),
        'w1':    s * jax.random.normal(ks[5], (hidden, ffn), jnp.float32),
        'w2':    s * jax.random.normal(ks[6], (ffn, hidden), jnp.float32),
        'g2':    jnp.ones((1, hidden), jnp.float32),
        'w_emb': s * jax.random.normal(ks[7], (1, hidden), jnp.float32),
        'w_fc':  s * jax.random.normal(ks[8], (hidden, prediction_length),
                                       jnp.float32),
    }


if __name__ == "__main__":
    key = jax.random.PRNGKey(0)
    k_x, k_p = jax.random.split(key)

    batch, seq_len, n_features = 2, 16, 4
    out_seq_len = 4
    x = jax.random.normal(k_x, (batch, seq_len, n_features), jnp.float32)
    params = init_params(k_p, prediction_length=out_seq_len)

    emb = chronos_forward(x, params, task='embedding', out_seq_len=out_seq_len)
    fct = chronos_forward(x, params, task='forecasting', out_seq_len=out_seq_len)
    jax.block_until_ready((emb, fct))

    assert emb.shape == (batch, seq_len - out_seq_len, n_features), emb.shape
    assert fct.shape == (batch, out_seq_len, n_features), fct.shape
    assert bool(jnp.all(jnp.isfinite(emb))) and bool(jnp.all(jnp.isfinite(fct)))
    print("KERNEL_OK")
</pallas_src>

<mosaic_0001>
module attributes {stable_mosaic.version = 11 : i64} {
  func.func @chronos_kernel(%arg0: i32, %arg1: memref<8x16xf32, #tpu.memory_space<vmem>>, %arg2: memref<1x32xf32, #tpu.memory_space<vmem>>, %arg3: memref<32x128xbf16, #tpu.memory_space<vmem>>, %arg4: memref<32x32xbf16, #tpu.memory_space<vmem>>, %arg5: memref<1x32xf32, #tpu.memory_space<vmem>>, %arg6: memref<32x128xbf16, #tpu.memory_space<vmem>>, %arg7: memref<128x32xbf16, #tpu.memory_space<vmem>>, %arg8: memref<1x32xf32, #tpu.memory_space<vmem>>, %arg9: memref<1x32xf32, #tpu.memory_space<vmem>>, %arg10: memref<32x128xbf16, #tpu.memory_space<vmem>>, %arg11: memref<8x16xf32, #tpu.memory_space<vmem>>, %arg12: memref<8x128xf32, #tpu.memory_space<vmem>>) attributes {dimension_semantics = [#tpu.dimension_semantics<parallel>], iteration_bounds = array<i64: 1>, scalar_prefetch = 0 : i64, scratch_operands = 0 : i64, tpu.core_type = #tpu.core_type<tc>, window_params = [{transform_indices = @transform_0, window_bounds = array<i64: 8, 16>}, {pipeline_mode = #tpu.pipeline_mode<synchronous>, transform_indices = @transform_1, window_bounds = array<i64: 1, 32>}, {pipeline_mode = #tpu.pipeline_mode<synchronous>, transform_indices = @transform_2, window_bounds = array<i64: 32, 128>}, {pipeline_mode = #tpu.pipeline_mode<synchronous>, transform_indices = @transform_3, window_bounds = array<i64: 32, 32>}, {pipeline_mode = #tpu.pipeline_mode<synchronous>, transform_indices = @transform_4, window_bounds = array<i64: 1, 32>}, {pipeline_mode = #tpu.pipeline_mode<synchronous>, transform_indices = @transform_5, window_bounds = array<i64: 32, 128>}, {pipeline_mode = #tpu.pipeline_mode<synchronous>, transform_indices = @transform_6, window_bounds = array<i64: 128, 32>}, {pipeline_mode = #tpu.pipeline_mode<synchronous>, transform_indices = @transform_7, window_bounds = array<i64: 1, 32>}, {pipeline_mode = #tpu.pipeline_mode<synchronous>, transform_indices = @transform_8, window_bounds = array<i64: 1, 32>}, {pipeline_mode = #tpu.pipeline_mode<synchronous>, transform_indices = @transform_9, window_bounds = array<i64: 32, 128>}, {transform_indices = @transform_10, window_bounds = array<i64: 8, 16>}, {transform_indices = @transform_11, window_bounds = array<i64: 8, 128>}]} {
    %c0 = arith.constant 0 : index
    %c0_0 = arith.constant 0 : index
    %0 = vector.load %arg1[%c0, %c0_0] : memref<8x16xf32, #tpu.memory_space<vmem>>, vector<8x16xf32>
    %1 = math.absf %0 : vector<8x16xf32>
    %cst = arith.constant dense<0.000000e+00> : vector<8xf32>
    %2 = vector.multi_reduction <add>, %1, %cst [1] : vector<8x16xf32> to vector<8xf32>
    %3 = vector.shape_cast %2 : vector<8xf32> to vector<8x1xf32>
    %cst_1 = arith.constant 6.250000e-02 : f32
    %4 = vector.broadcast %cst_1 : f32 to vector<8x1xf32>
    %5 = arith.mulf %3, %4 : vector<8x1xf32>
    %cst_2 = arith.constant 9.99999997E-7 : f32
    %6 = vector.broadcast %cst_2 : f32 to vector<8x1xf32>
    %7 = arith.addf %5, %6 : vector<8x1xf32>
    %8 = vector.broadcast %7 : vector<8x1xf32> to vector<8x16xf32>
    %9 = arith.divf %0, %8 : vector<8x16xf32>
    %c0_3 = arith.constant 0 : index
    %c0_4 = arith.constant 0 : index
    %10 = vector.load %arg2[%c0_3, %c0_4] : memref<1x32xf32, #tpu.memory_space<vmem>>, vector<1x32xf32>
    %11 = vector.shape_cast %9 : vector<8x16xf32> to vector<8x16x1xf32>
    %12 = vector.shape_cast %10 : vector<1x32xf32> to vector<1x1x32xf32>
    %13 = vector.broadcast %11 : vector<8x16x1xf32> to vector<8x16x32xf32>
    %14 = vector.broadcast %12 : vector<1x1x32xf32> to vector<8x16x32xf32>
    %15 = arith.mulf %13, %14 : vector<8x16x32xf32>
    %16 = vector.shape_cast %15 : vector<8x16x32xf32> to vector<128x32xf32>
    %17 = arith.mulf %16, %16 : vector<128x32xf32>
    %cst_5 = arith.constant dense<0.000000e+00> : vector<128xf32>
    %18 = vector.multi_reduction <add>, %17, %cst_5 [1] : vector<128x32xf32> to vector<128xf32>
    %19 = vector.shape_cast %18 : vector<128xf32> to vector<128x1xf32>
    %cst_6 = arith.constant 3.200000e+01 : f32
    %20 = vector.broadcast %cst_6 : f32 to vector<128x1xf32>
    %21 = arith.divf %19, %20 : vector<128x1xf32>
    %cst_7 = arith.constant 9.99999997E-7 : f32
    %22 = vector.broadcast %cst_7 : f32 to vector<128x1xf32>
    %23 = arith.addf %21, %22 : vector<128x1xf32>
    %24 = math.rsqrt %23 : vector<128x1xf32>
    %25 = vector.broadcast %24 : vector<128x1xf32> to vector<128x32xf32>
    %26 = arith.mulf %16, %25 : vector<128x32xf32>
    %c0_8 = arith.constant 0 : index
    %c0_9 = arith.constant 0 : index
    %27 = vector.load %arg5[%c0_8, %c0_9] : memref<1x32xf32, #tpu.memory_space<vmem>>, vector<1x32xf32>
    %28 = vector.broadcast %27 : vector<1x32xf32> to vector<128x32xf32>
    %29 = arith.mulf %26, %28 : vector<128x32xf32>
    %30 = arith.truncf %29 : vector<128x32xf32> to vector<128x32xbf16>
    %c0_10 = arith.constant 0 : index
    %c0_11 = arith.constant 0 : index
    %31 = vector.load %arg3[%c0_10, %c0_11] : memref<32x128xbf16, #tpu.memory_space<vmem>>, vector<32x128xbf16>
    %cst_12 = arith.constant dense<0.000000e+00> : vector<128x128xf32>
    %32 = tpu.matmul %30, %31, %cst_12 {dimension_numbers = #tpu.dot_dimension_numbers<[1], [0], [0], [1], [0, 0, 1, 1], [], []>} : vector<128x32xbf16>, vector<32x128xbf16>, vector<128x128xf32> -> vector<128x128xf32>
    %33 = vector.extract_strided_slice %32 {offsets = [0, 0], sizes = [128, 32], strides = [1, 1]} : vector<128x128xf32> to vector<128x32xf32>
    %34 = vector.shape_cast %33 : vector<128x32xf32> to vector<8x16x32xf32>
    %35 = vector.extract_strided_slice %32 {offsets = [0, 32], sizes = [128, 32], strides = [1, 1]} : vector<128x128xf32> to vector<128x32xf32>
    %36 = vector.shape_cast %35 : vector<128x32xf32> to vector<8x16x32xf32>
    %37 = vector.extract_strided_slice %32 {offsets = [0, 64], sizes = [128, 32], strides = [1, 1]} : vector<128x128xf32> to vector<128x32xf32>
    %38 = vector.shape_cast %37 : vector<128x32xf32> to vector<8x16x32xf32>
    %39 = arith.truncf %34 : vector<8x16x32xf32> to vector<8x16x32xbf16>
    %40 = arith.truncf %36 : vector<8x16x32xf32> to vector<8x16x32xbf16>
    "tpu.trace_start"() <{level = 10 : i32, message = "blk,bmk->blm"}> : () -> ()
    %cst_13 = arith.constant dense<0.000000e+00> : vector<8x16x16xf32>
    %41 = tpu.matmul %39, %40, %cst_13 {dimension_numbers = #tpu.dot_dimension_numbers<[2], [2], [1], [1], [0, 0, 0, 1, 1, 1], [0], [0]>} : vector<8x16x32xbf16>, vector<8x16x32xbf16>, vector<8x16x16xf32> -> vector<8x16x16xf32>
    "tpu.trace_stop"() : () -> ()
    %cst_14 = arith.constant 0.176776692 : f32
    %42 = vector.broadcast %cst_14 : f32 to vector<8x16x16xf32>
    %43 = arith.mulf %41, %42 : vector<8x16x16xf32>
    %44 = tpu.iota {dimensions = array<i32: 2>} : vector<1x1x16xi32>
    %c16_i32 = arith.constant 16 : i32
    %45 = vector.broadcast %c16_i32 : i32 to vector<1x1x16xi32>
    %46 = arith.cmpi slt, %44, %45 : vector<1x1x16xi32>
    %cst_15 = arith.constant -1.000000e+30 : f32
    %47 = vector.shape_cast %46 : vector<1x1x16xi1> to vector<1x1x16xi1>
    %48 = vector.broadcast %47 : vector<1x1x16xi1> to vector<8x16x16xi1>
    %49 = vector.broadcast %cst_15 : f32 to vector<8x16x16xf32>
    %50 = arith.select %48, %43, %49 : vector<8x16x16xi1>, vector<8x16x16xf32>
    %cst_16 = arith.constant dense<0xFF800000> : vector<8x16xf32>
    %51 = vector.multi_reduction <maximumf>, %50, %cst_16 [2] : vector<8x16x16xf32> to vector<8x16xf32>
    %52 = vector.shape_cast %51 : vector<8x16xf32> to vector<8x16x1xf32>
    %53 = vector.broadcast %52 : vector<8x16x1xf32> to vector<8x16x16xf32>
    %54 = arith.subf %50, %53 : vector<8x16x16xf32>
    %55 = math.exp %54 : vector<8x16x16xf32>
    %cst_17 = arith.constant dense<0.000000e+00> : vector<8x16xf32>
    %56 = vector.multi_reduction <add>, %55, %cst_17 [2] : vector<8x16x16xf32> to vector<8x16xf32>
    %57 = vector.shape_cast %56 : vector<8x16xf32> to vector<8x16x1xf32>
    %58 = tpu.reciprocal %57 {approx = true} : vector<8x16x1xf32> -> vector<8x16x1xf32>
    %59 = vector.broadcast %58 : vector<8x16x1xf32> to vector<8x16x16xf32>
    %60 = arith.mulf %55, %59 : vector<8x16x16xf32>
    %61 = arith.truncf %60 : vector<8x16x16xf32> to vector<8x16x16xbf16>
    %62 = arith.truncf %38 : vector<8x16x32xf32> to vector<8x16x32xbf16>
    "tpu.trace_start"() <{level = 10 : i32, message = "blm,bmk->blk"}> : () -> ()
    %cst_18 = arith.constant dense<0.000000e+00> : vector<8x16x32xf32>
    %63 = tpu.matmul %61, %62, %cst_18 {dimension_numbers = #tpu.dot_dimension_numbers<[2], [1], [1], [2], [0, 0, 0, 1, 1, 2], [0], [0]>} : vector<8x16x16xbf16>, vector<8x16x32xbf16>, vector<8x16x32xf32> -> vector<8x16x32xf32>
    "tpu.trace_stop"() : () -> ()
    %64 = vector.shape_cast %63 : vector<8x16x32xf32> to vector<128x32xf32>
    %65 = arith.truncf %64 : vector<128x32xf32> to vector<128x32xbf16>
    %c0_19 = arith.constant 0 : index
    %c0_20 = arith.constant 0 : index
    %66 = vector.load %arg4[%c0_19, %c0_20] : memref<32x32xbf16, #tpu.memory_space<vmem>>, vector<32x32xbf16>
    %cst_21 = arith.constant dense<0.000000e+00> : vector<128x32xf32>
    %67 = tpu.matmul %65, %66, %cst_21 {dimension_numbers = #tpu.dot_dimension_numbers<[1], [0], [0], [1], [0, 0, 1, 1], [], []>} : vector<128x32xbf16>, vector<32x32xbf16>, vector<128x32xf32> -> vector<128x32xf32>
    %68 = arith.addf %16, %67 : vector<128x32xf32>
    %69 = arith.mulf %68, %68 : vector<128x32xf32>
    %cst_22 = arith.constant dense<0.000000e+00> : vector<128xf32>
    %70 = vector.multi_reduction <add>, %69, %cst_22 [1] : vector<128x32xf32> to vector<128xf32>
    %71 = vector.shape_cast %70 : vector<128xf32> to vector<128x1xf32>
    %cst_23 = arith.constant 3.200000e+01 : f32
    %72 = vector.broadcast %cst_23 : f32 to vector<128x1xf32>
    %73 = arith.divf %71, %72 : vector<128x1xf32>
    %cst_24 = arith.constant 9.99999997E-7 : f32
    %74 = vector.broadcast %cst_24 : f32 to vector<128x1xf32>
    %75 = arith.addf %73, %74 : vector<128x1xf32>
    %76 = math.rsqrt %75 : vector<128x1xf32>
    %77 = vector.broadcast %76 : vector<128x1xf32> to vector<128x32xf32>
    %78 = arith.mulf %68, %77 : vector<128x32xf32>
    %c0_25 = arith.constant 0 : index
    %c0_26 = arith.constant 0 : index
    %79 = vector.load %arg8[%c0_25, %c0_26] : memref<1x32xf32, #tpu.memory_space<vmem>>, vector<1x32xf32>
    %80 = vector.broadcast %79 : vector<1x32xf32> to vector<128x32xf32>
    %81 = arith.mulf %78, %80 : vector<128x32xf32>
    %82 = arith.truncf %81 : vector<128x32xf32> to vector<128x32xbf16>
    %c0_27 = arith.constant 0 : index
    %c0_28 = arith.constant 0 : index
    %83 = vector.load %arg6[%c0_27, %c0_28] : memref<32x128xbf16, #tpu.memory_space<vmem>>, vector<32x128xbf16>
    %cst_29 = arith.constant dense<0.000000e+00> : vector<128x128xf32>
    %84 = tpu.matmul %82, %83, %cst_29 {dimension_numbers = #tpu.dot_dimension_numbers<[1], [0], [0], [1], [0, 0, 1, 1], [], []>} : vector<128x32xbf16>, vector<32x128xbf16>, vector<128x128xf32> -> vector<128x128xf32>
    %cst_30 = arith.constant 0.000000e+00 : f32
    %85 = vector.broadcast %cst_30 : f32 to vector<128x128xf32>
    %86 = arith.maximumf %84, %85 : vector<128x128xf32>
    %87 = arith.truncf %86 : vector<128x128xf32> to vector<128x128xbf16>
    %c0_31 = arith.constant 0 : index
    %c0_32 = arith.constant 0 : index
    %88 = vector.load %arg7[%c0_31, %c0_32] : memref<128x32xbf16, #tpu.memory_space<vmem>>, vector<128x32xbf16>
    %cst_33 = arith.constant dense<0.000000e+00> : vector<128x32xf32>
    %89 = tpu.matmul %87, %88, %cst_33 {dimension_numbers = #tpu.dot_dimension_numbers<[1], [0], [0], [1], [0, 0, 1, 1], [], []>} : vector<128x128xbf16>, vector<128x32xbf16>, vector<128x32xf32> -> vector<128x32xf32>
    %90 = arith.addf %68, %89 : vector<128x32xf32>
    %91 = vector.shape_cast %90 : vector<128x32xf32> to vector<8x16x32xf32>
    %c0_34 = arith.constant 0 : index
    %c0_35 = arith.constant 0 : index
    %92 = vector.load %arg9[%c0_34, %c0_35] : memref<1x32xf32, #tpu.memory_space<vmem>>, vector<1x32xf32>
    %93 = vector.shape_cast %92 : vector<1x32xf32> to vector<1x1x32xf32>
    %94 = vector.broadcast %93 : vector<1x1x32xf32> to vector<8x16x32xf32>
    %95 = arith.mulf %91, %94 : vector<8x16x32xf32>
    %cst_36 = arith.constant dense<0.000000e+00> : vector<8x16xf32>
    %96 = vector.multi_reduction <add>, %95, %cst_36 [2] : vector<8x16x32xf32> to vector<8x16xf32>
    %c0_37 = arith.constant 0 : index
    %c0_38 = arith.constant 0 : index
    %97 = vector.load %arg11[%c0_37, %c0_38] : memref<8x16xf32, #tpu.memory_space<vmem>>, vector<8x16xf32>
    tpu.vector_store %arg11[%c0_37, %c0_38], %96 {strides = array<i32>} : memref<8x16xf32, #tpu.memory_space<vmem>>, vector<8x16xf32>,
    %98 = tpu.iota {dimensions = array<i32: 1>} : vector<1x16x1xi32>
    %c16_i32_39 = arith.constant 16 : i32
    %99 = vector.broadcast %c16_i32_39 : i32 to vector<1x16x1xi32>
    %100 = arith.cmpi slt, %98, %99 : vector<1x16x1xi32>
    %101 = arith.extui %100 : vector<1x16x1xi1> to vector<1x16x1xi32>
    %102 = arith.sitofp %101 : vector<1x16x1xi32> to vector<1x16x1xf32>
    %103 = vector.broadcast %102 : vector<1x16x1xf32> to vector<8x16x32xf32>
    %104 = arith.mulf %91, %103 : vector<8x16x32xf32>
    %cst_40 = arith.constant dense<0.000000e+00> : vector<8x32xf32>
    %105 = vector.multi_reduction <add>, %104, %cst_40 [1] : vector<8x16x32xf32> to vector<8x32xf32>
    %cst_41 = arith.constant 6.250000e-02 : f32
    %106 = vector.broadcast %cst_41 : f32 to vector<8x32xf32>
    %107 = arith.mulf %105, %106 : vector<8x32xf32>
    %108 = arith.truncf %107 : vector<8x32xf32> to vector<8x32xbf16>
    %c0_42 = arith.constant 0 : index
    %c0_43 = arith.constant 0 : index
    %109 = vector.load %arg10[%c0_42, %c0_43] : memref<32x128xbf16, #tpu.memory_space<vmem>>, vector<32x128xbf16>
    %cst_44 = arith.constant dense<0.000000e+00> : vector<8x128xf32>
    %110 = tpu.matmul %108, %109, %cst_44 {dimension_numbers = #tpu.dot_dimension_numbers<[1], [0], [0], [1], [0, 0, 1, 1], [], []>} : vector<8x32xbf16>, vector<32x128xbf16>, vector<8x128xf32> -> vector<8x128xf32>
    %111 = vector.broadcast %7 : vector<8x1xf32> to vector<8x128xf32>
    %112 = arith.mulf %110, %111 : vector<8x128xf32>
    %c0_45 = arith.constant 0 : index
    %c0_46 = arith.constant 0 : index
    %113 = vector.load %arg12[%c0_45, %c0_46] : memref<8x128xf32, #tpu.memory_space<vmem>>, vector<8x128xf32>
    tpu.vector_store %arg12[%c0_45, %c0_46], %112 {strides = array<i32>} : memref<8x128xf32, #tpu.memory_space<vmem>>, vector<8x128xf32>,
    return
  }
  func.func @transform_0(%arg0: i32) -> (i32, i32) {
    %c0_i32 = arith.constant 0 : i32
    %c0_i32_0 = arith.constant 0 : i32
    return %arg0, %c0_i32 : i32, i32
  }
  func.func @transform_1(%arg0: i32) -> (i32, i32) {
    %c0_i32 = arith.constant 0 : i32
    %c0_i32_0 = arith.constant 0 : i32
    %c0_i32_1 = arith.constant 0 : i32
    return %c0_i32, %c0_i32_0 : i32, i32
  }
  func.func @transform_2(%arg0: i32) -> (i32, i32) {
    %c0_i32 = arith.constant 0 : i32
    %c0_i32_0 = arith.constant 0 : i32
    %c0_i32_1 = arith.constant 0 : i32
    return %c0_i32, %c0_i32_0 : i32, i32
  }
  func.func @transform_3(%arg0: i32) -> (i32, i32) {
    %c0_i32 = arith.constant 0 : i32
    %c0_i32_0 = arith.constant 0 : i32
    %c0_i32_1 = arith.constant 0 : i32
    return %c0_i32, %c0_i32_0 : i32, i32
  }
  func.func @transform_4(%arg0: i32) -> (i32, i32) {
    %c0_i32 = arith.constant 0 : i32
    %c0_i32_0 = arith.constant 0 : i32
    %c0_i32_1 = arith.constant 0 : i32
    return %c0_i32, %c0_i32_0 : i32, i32
  }
  func.func @transform_5(%arg0: i32) -> (i32, i32) {
    %c0_i32 = arith.constant 0 : i32
    %c0_i32_0 = arith.constant 0 : i32
    %c0_i32_1 = arith.constant 0 : i32
    return %c0_i32, %c0_i32_0 : i32, i32
  }
  func.func @transform_6(%arg0: i32) -> (i32, i32) {
    %c0_i32 = arith.constant 0 : i32
    %c0_i32_0 = arith.constant 0 : i32
    %c0_i32_1 = arith.constant 0 : i32
    return %c0_i32, %c0_i32_0 : i32, i32
  }
  func.func @transform_7(%arg0: i32) -> (i32, i32) {
    %c0_i32 = arith.constant 0 : i32
    %c0_i32_0 = arith.constant 0 : i32
    %c0_i32_1 = arith.constant 0 : i32
    return %c0_i32, %c0_i32_0 : i32, i32
  }
  func.func @transform_8(%arg0: i32) -> (i32, i32) {
    %c0_i32 = arith.constant 0 : i32
    %c0_i32_0 = arith.constant 0 : i32
    %c0_i32_1 = arith.constant 0 : i32
    return %c0_i32, %c0_i32_0 : i32, i32
  }
  func.func @transform_9(%arg0: i32) -> (i32, i32) {
    %c0_i32 = arith.constant 0 : i32
    %c0_i32_0 = arith.constant 0 : i32
    %c0_i32_1 = arith.constant 0 : i32
    return %c0_i32, %c0_i32_0 : i32, i32
  }
  func.func @transform_10(%arg0: i32) -> (i32, i32) {
    %c0_i32 = arith.constant 0 : i32
    %c0_i32_0 = arith.constant 0 : i32
    return %arg0, %c0_i32 : i32, i32
  }
  func.func @transform_11(%arg0: i32) -> (i32, i32) {
    %c0_i32 = arith.constant 0 : i32
    %c0_i32_0 = arith.constant 0 : i32
    return %arg0, %c0_i32 : i32, i32
  }
}

</mosaic_0001>

<llo_original>
// kernel: tpu_custom_call.1
$region0: #{tpu_custom_call.1}
  #allocation0 [shape = 'u32[]', space=smem, size = 0x4, offset = 0x4, fixed_abs, tag = 'smem constant byte address 0x4 - core index']
  #allocation1 [shape = 'u32[72,128]{1,0:T(1,128)}', space=vmem, size = 0x9000, scoped, tag = 'internal scratch']
  %s0 = inlined_call_operand.vmem [shape: f32[8,16], index: 0, kind: input, shape index: {}]
  %s1 = inlined_call_operand.vmem [shape: f32[1,32], index: 1, kind: input, shape index: {}]
  %s2 = inlined_call_operand.vmem [shape: bf16[32,128], index: 2, kind: input, shape index: {}]
  %s3 = inlined_call_operand.vmem [shape: bf16[32,32], index: 3, kind: input, shape index: {}]
  %s4 = inlined_call_operand.vmem [shape: f32[1,32], index: 4, kind: input, shape index: {}]
  %s5 = inlined_call_operand.vmem [shape: bf16[32,128], index: 5, kind: input, shape index: {}]
  %s6 = inlined_call_operand.vmem [shape: bf16[128,32], index: 6, kind: input, shape index: {}]
  %s7 = inlined_call_operand.vmem [shape: f32[1,32], index: 7, kind: input, shape index: {}]
  %s8 = inlined_call_operand.vmem [shape: f32[1,32], index: 8, kind: input, shape index: {}]
  %s9 = inlined_call_operand.vmem [shape: bf16[32,128], index: 9, kind: input, shape index: {}]
  %s10 = inlined_call_operand.hbm [shape: f32[8,16], index: 10, kind: output, shape index: {0}]
  %s11 = inlined_call_operand.hbm [shape: f32[8,128], index: 11, kind: output, shape index: {1}]
  %12 = xla_tuple %s10, %s11
  %s13 = sld [smem:[#allocation0]]
  $region58: #{tpu_custom_call.1} parent=0
    _
  %s15 = ssub.s32 1, %s13
  %s16 = scalar_select 0, %s15, %s13
  $region1: #{tpu_custom_call.1} parent=0
    #allocation2 [shape = 'u8[4096]{0}', space=vmem, size = 0x1000, scoped, tag = 'output window, operand 0, single buffered']
    #allocation3 [shape = 's32[1]{0}', space=sflag, size = 0x4, scoped, tag = 'scoped memory for tpu_custom_call.1']
    #allocation4 [shape = 'u8[4096]{0}', space=vmem, size = 0x1000, scoped, tag = 'output window, operand 1, single buffered']
    #allocation5 [shape = 's32[1]{0}', space=sflag, size = 0x4, scoped, tag = 'scoped memory for tpu_custom_call.1']
    %17 = vsyncpa [#allocation3], 0
    %18 = vsyncpa [#allocation5], 0
    // Predicated region
    $region2: #{tpu_custom_call.1} parent=1 // pred_check
      _
    $region3: #{tpu_custom_call.1} parent=1 // pred_check_branch
      %20 = sbr.rel (0) target = $region5
    $region4: #{tpu_custom_call.1} parent=1 // pred_region
      _
    $region5: #{tpu_custom_call.1} parent=1 // pred_fallthru
      _
    // Predicated region
    $region6: #{tpu_custom_call.1} parent=1 // pred_check
      _
    $region7: #{tpu_custom_call.1} parent=1 // pred_check_branch
      %22 = sbr.rel (0) target = $region9
    $region8: #{tpu_custom_call.1} parent=1 // pred_region
      _
    $region9: #{tpu_custom_call.1} parent=1 // pred_fallthru
      _
    // Predicated region
    $region10: #{tpu_custom_call.1} parent=1 // pred_check
      _
    $region11: #{tpu_custom_call.1} parent=1 // pred_check_branch
      %24 = sbr.rel (0) target = $region13
    $region12: #{tpu_custom_call.1} parent=1 // pred_region
      _
    $region13: #{tpu_custom_call.1} parent=1 // pred_fallthru
      _
    // Predicated region
    $region14: #{tpu_custom_call.1} parent=1 // pred_check
      _
    $region15: #{tpu_custom_call.1} parent=1 // pred_check_branch
      %26 = sbr.rel (0) target = $region17
    $region16: #{tpu_custom_call.1} parent=1 // pred_region
      _
    $region17: #{tpu_custom_call.1} parent=1 // pred_fallthru
      _
    // Predicated region
    $region18: #{tpu_custom_call.1} parent=1 // pred_check
      _
    $region19: #{tpu_custom_call.1} parent=1 // pred_check_branch
      %28 = sbr.rel (0) target = $region21
    $region20: #{tpu_custom_call.1} parent=1 // pred_region
      _
    $region21: #{tpu_custom_call.1} parent=1 // pred_fallthru
      _
    // Predicated region
    $region22: #{tpu_custom_call.1} parent=1 // pred_check
      _
    $region23: #{tpu_custom_call.1} parent=1 // pred_check_branch
      %30 = sbr.rel (0) target = $region25
    $region24: #{tpu_custom_call.1} parent=1 // pred_region
      _
    $region25: #{tpu_custom_call.1} parent=1 // pred_fallthru
      _
    // Predicated region
    $region26: #{tpu_custom_call.1} parent=1 // pred_check
      _
    $region27: #{tpu_custom_call.1} parent=1 // pred_check_branch
      %32 = sbr.rel (0) target = $region29
    $region28: #{tpu_custom_call.1} parent=1 // pred_region
      _
    $region29: #{tpu_custom_call.1} parent=1 // pred_fallthru
      _
    // Predicated region
    $region30: #{tpu_custom_call.1} parent=1 // pred_check
      _
    $region31: #{tpu_custom_call.1} parent=1 // pred_check_branch
      %34 = sbr.rel (0) target = $region33
    $region32: #{tpu_custom_call.1} parent=1 // pred_region
      _
    $region33: #{tpu_custom_call.1} parent=1 // pred_fallthru
      _
    // Predicated region
    $region34: #{tpu_custom_call.1} parent=1 // pred_check
      _
    $region35: #{tpu_custom_call.1} parent=1 // pred_check_branch
      %36 = sbr.rel (0) target = $region37
    $region36: #{tpu_custom_call.1} parent=1 // pred_region
      _
    $region37: #{tpu_custom_call.1} parent=1 // pred_fallthru
      _
    // Predicated region
    $region38: #{tpu_custom_call.1} parent=1 // pred_check
      _
    $region39: #{tpu_custom_call.1} parent=1 // pred_check_branch
      %38 = sbr.rel (0) target = $region41
    $region40: #{tpu_custom_call.1} parent=1 // pred_region
      _
    $region41: #{tpu_custom_call.1} parent=1 // pred_fallthru
      _
    %v40 = vld [vmem:[%s0] sm:$0xff]
    %v41 = vand.u32 2147483647, %v40
    %vm42 = vcmask 130048
    %v43 = vsel %vm42, %v41, 0.0
    %44 = vadd.xlane.f32.xlu0 %v43
    %v45 = vpop.xlane.xlu0 %44
    %v46 = vmul.f32 %v45, 0.0625
    %v47 = vadd.f32 %v46, 1e-06
    %v48 = vrcp.pop %v47
    %v49 = vmul.f32 %v47, %v48
    %v50 = vsub.f32 1.0, %v49
    %v51 = vmul.f32 %v48, %v50
    %v52 = vadd.f32 %v48, %v51
    %vm53 = vweird.f32 %v47
    %vm54 = vweird.f32 %v48
    %vm55 = vmor %vm53, %vm54
    %v56 = vsel %vm55, %v48, %v52
    %v57 = vand.u32 2147483647, %v47
    %vm58 = vcmp.eq.f32.partialorder %v57, 8.507059e+37
    %v59 = vand.u32 %v47, 2147483648
    %v60 = vor.u32 1.1754944e-38, %v59
    %v61 = vsel %vm58, %v60, %v56
    %v62 = vmul.f32 %v40, %v61
    %v63 = vld [vmem:[%s1] sm:$0x1]
    %v64 = vperm.slane %v62, 0
    %v65 = vlaneseq
    %v66 = vshrl.u32 %v65, 7
    %68 = vset.pattern.permute.xlu0 %v66
    %69 = vperm.xlu0 %68, %v64
    %v70 = vpop.permute.xlu0 %69
    %v71 = vlaneseq
    %v72 = vshrl.u32 %v71, 7
    %v73 = vadd.s32 %v72, 8
    %74 = vset.pattern.permute.xlu0 %v73
    %75 = vperm.xlu0 %74, %v64
    %v76 = vpop.permute.xlu0 %75
    %v77 = vperm.slane %v62, 1
    %v78 = vlaneseq
    %v79 = vshrl.u32 %v78, 7
    %81 = vset.pattern.permute.xlu0 %v79
    %82 = vperm.xlu0 %81, %v77
    %v83 = vpop.permute.xlu0 %82
    %v84 = vlaneseq
    %v85 = vshrl.u32 %v84, 7
    %v86 = vadd.s32 %v85, 8
    %87 = vset.pattern.permute.xlu0 %v86
    %88 = vperm.xlu0 %87, %v77
    %v89 = vpop.permute.xlu0 %88
    %v90 = vperm.slane %v62, 2
    %v91 = vlaneseq
    %v92 = vshrl.u32 %v91, 7
    %94 = vset.pattern.permute.xlu0 %v92
    %95 = vperm.xlu0 %94, %v90
    %v96 = vpop.permute.xlu0 %95
    %v97 = vlaneseq
    %v98 = vshrl.u32 %v97, 7
    %v99 = vadd.s32 %v98, 8
    %100 = vset.pattern.permute.xlu0 %v99
    %101 = vperm.xlu0 %100, %v90
    %v102 = vpop.permute.xlu0 %101
    %v103 = vperm.slane %v62, 3
    %v104 = vlaneseq
    %v105 = vshrl.u32 %v104, 7
    %107 = vset.pattern.permute.xlu0 %v105
    %108 = vperm.xlu0 %107, %v103
    %v109 = vpop.permute.xlu0 %108
    %v110 = vlaneseq
    %v111 = vshrl.u32 %v110, 7
    %v112 = vadd.s32 %v111, 8
    %113 = vset.pattern.permute.xlu0 %v112
    %114 = vperm.xlu0 %113, %v103
    %v115 = vpop.permute.xlu0 %114
    %v116 = vperm.slane %v62, 4
    %v117 = vlaneseq
    %v118 = vshrl.u32 %v117, 7
    %120 = vset.pattern.permute.xlu0 %v118
    %121 = vperm.xlu0 %120, %v116
    %v122 = vpop.permute.xlu0 %121
    %v123 = vlaneseq
    %v124 = vshrl.u32 %v123, 7
    %v125 = vadd.s32 %v124, 8
    %126 = vset.pattern.permute.xlu0 %v125
    %127 = vperm.xlu0 %126, %v116
    %v128 = vpop.permute.xlu0 %127
    %v129 = vperm.slane %v62, 5
    %v130 = vlaneseq
    %v131 = vshrl.u32 %v130, 7
    %133 = vset.pattern.permute.xlu0 %v131
    %134 = vperm.xlu0 %133, %v129
    %v135 = vpop.permute.xlu0 %134
    %v136 = vlaneseq
    %v137 = vshrl.u32 %v136, 7
    %v138 = vadd.s32 %v137, 8
    %139 = vset.pattern.permute.xlu0 %v138
    %140 = vperm.xlu0 %139, %v129
    %v141 = vpop.permute.xlu0 %140
    %v142 = vperm.slane %v62, 6
    %v143 = vlaneseq
    %v144 = vshrl.u32 %v143, 7
    %146 = vset.pattern.permute.xlu0 %v144
    %147 = vperm.xlu0 %146, %v142
    %v148 = vpop.permute.xlu0 %147
    %v149 = vlaneseq
    %v150 = vshrl.u32 %v149, 7
    %v151 = vadd.s32 %v150, 8
    %152 = vset.pattern.permute.xlu0 %v151
    %153 = vperm.xlu0 %152, %v142
    %v154 = vpop.permute.xlu0 %153
    %v155 = vperm.slane %v62, 7
    %v156 = vlaneseq
    %v157 = vshrl.u32 %v156, 7
    %159 = vset.pattern.permute.xlu0 %v157
    %160 = vperm.xlu0 %159, %v155
    %v161 = vpop.permute.xlu0 %160
    %v162 = vlaneseq
    %v163 = vshrl.u32 %v162, 7
    %v164 = vadd.s32 %v163, 8
    %165 = vset.pattern.permute.xlu0 %v164
    %166 = vperm.xlu0 %165, %v155
    %v167 = vpop.permute.xlu0 %166
    %v169 = vperm.slane %v63, 0
    %v171 = vmul.f32 %v70, %v169
    %v172 = vmul.f32 %v76, %v169
    %v173 = vmul.f32 %v83, %v169
    %v174 = vmul.f32 %v89, %v169
    %v175 = vmul.f32 %v96, %v169
    %v176 = vmul.f32 %v102, %v169
    %v177 = vmul.f32 %v109, %v169
    %v178 = vmul.f32 %v115, %v169
    %v179 = vmul.f32 %v122, %v169
    %v180 = vmul.f32 %v128, %v169
    %v181 = vmul.f32 %v135, %v169
    %v182 = vmul.f32 %v141, %v169
    %v183 = vmul.f32 %v148, %v169
    %v184 = vmul.f32 %v154, %v169
    %v185 = vmul.f32 %v161, %v169
    %v186 = vmul.f32 %v167, %v169
    %v187 = vmul.f32 %v171, %v171
    %v188 = vmul.f32 %v172, %v172
    %v189 = vmul.f32 %v173, %v173
    %v190 = vmul.f32 %v174, %v174
    %v191 = vmul.f32 %v175, %v175
    %v192 = vmul.f32 %v176, %v176
    %v193 = vmul.f32 %v177, %v177
    %v194 = vmul.f32 %v178, %v178
    %v195 = vmul.f32 %v179, %v179
    %v196 = vmul.f32 %v180, %v180
    %v197 = vmul.f32 %v181, %v181
    %v198 = vmul.f32 %v182, %v182
    %v199 = vmul.f32 %v183, %v183
    %v200 = vmul.f32 %v184, %v184
    %v201 = vmul.f32 %v185, %v185
    %v202 = vmul.f32 %v186, %v186
    %vm203 = vcmask 261120
    %v204 = vsel %vm203, %v187, 0.0
    %205 = vadd.xlane.f32.xlu0 %v204
    %v206 = vpop.xlane.xlu0 %205
    %v207 = vsel %vm203, %v188, 0.0
    %208 = vadd.xlane.f32.xlu0 %v207
    %v209 = vpop.xlane.xlu0 %208
    %v210 = vsel %vm203, %v189, 0.0
    %211 = vadd.xlane.f32.xlu0 %v210
    %v212 = vpop.xlane.xlu0 %211
    %v213 = vsel %vm203, %v190, 0.0
    %214 = vadd.xlane.f32.xlu0 %v213
    %v215 = vpop.xlane.xlu0 %214
    %v216 = vsel %vm203, %v191, 0.0
    %217 = vadd.xlane.f32.xlu0 %v216
    %v218 = vpop.xlane.xlu0 %217
    %v219 = vsel %vm203, %v192, 0.0
    %220 = vadd.xlane.f32.xlu0 %v219
    %v221 = vpop.xlane.xlu0 %220
    %v222 = vsel %vm203, %v193, 0.0
    %223 = vadd.xlane.f32.xlu0 %v222
    %v224 = vpop.xlane.xlu0 %223
    %v225 = vsel %vm203, %v194, 0.0
    %226 = vadd.xlane.f32.xlu0 %v225
    %v227 = vpop.xlane.xlu0 %226
    %v228 = vsel %vm203, %v195, 0.0
    %229 = vadd.xlane.f32.xlu0 %v228
    %v230 = vpop.xlane.xlu0 %229
    %v231 = vsel %vm203, %v196, 0.0
    %232 = vadd.xlane.f32.xlu0 %v231
    %v233 = vpop.xlane.xlu0 %232
    %v234 = vsel %vm203, %v197, 0.0
    %235 = vadd.xlane.f32.xlu0 %v234
    %v236 = vpop.xlane.xlu0 %235
    %v237 = vsel %vm203, %v198, 0.0
    %238 = vadd.xlane.f32.xlu0 %v237
    %v239 = vpop.xlane.xlu0 %238
    %v240 = vsel %vm203, %v199, 0.0
    %241 = vadd.xlane.f32.xlu0 %v240
    %v242 = vpop.xlane.xlu0 %241
    %v243 = vsel %vm203, %v200, 0.0
    %244 = vadd.xlane.f32.xlu0 %v243
    %v245 = vpop.xlane.xlu0 %244
    %v246 = vsel %vm203, %v201, 0.0
    %247 = vadd.xlane.f32.xlu0 %v246
    %v248 = vpop.xlane.xlu0 %247
    %v249 = vsel %vm203, %v202, 0.0
    %250 = vadd.xlane.f32.xlu0 %v249
    %v251 = vpop.xlane.xlu0 %250
    %v252 = vrcp.pop 32.0
    %v253 = vmul.f32 32.0, %v252
    %v254 = vsub.f32 1.0, %v253
    %v255 = vmul.f32 %v252, %v254
    %v256 = vadd.f32 %v252, %v255
    %vm257 = vweird.f32 %v252
    %v258 = vsel %vm257, %v252, %v256
    %v259 = vmul.f32 %v206, %v258
    %v260 = vmul.f32 %v209, %v258
    %v261 = vmul.f32 %v212, %v258
    %v262 = vmul.f32 %v215, %v258
    %v263 = vmul.f32 %v218, %v258
    %v264 = vmul.f32 %v221, %v258
    %v265 = vmul.f32 %v224, %v258
    %v266 = vmul.f32 %v227, %v258
    %v267 = vmul.f32 %v230, %v258
    %v268 = vmul.f32 %v233, %v258
    %v269 = vmul.f32 %v236, %v258
    %v270 = vmul.f32 %v239, %v258
    %v271 = vmul.f32 %v242, %v258
    %v272 = vmul.f32 %v245, %v258
    %v273 = vmul.f32 %v248, %v258
    %v274 = vmul.f32 %v251, %v258
    %v275 = vadd.f32 %v259, 1e-06
    %v276 = vadd.f32 %v260, 1e-06
    %v277 = vadd.f32 %v261, 1e-06
    %v278 = vadd.f32 %v262, 1e-06
    %v279 = vadd.f32 %v263, 1e-06
    %v280 = vadd.f32 %v264, 1e-06
    %v281 = vadd.f32 %v265, 1e-06
    %v282 = vadd.f32 %v266, 1e-06
    %v283 = vadd.f32 %v267, 1e-06
    %v284 = vadd.f32 %v268, 1e-06
    %v285 = vadd.f32 %v269, 1e-06
    %v286 = vadd.f32 %v270, 1e-06
    %v287 = vadd.f32 %v271, 1e-06
    %v288 = vadd.f32 %v272, 1e-06
    %v289 = vadd.f32 %v273, 1e-06
    %v290 = vadd.f32 %v274, 1e-06
    %v291 = vrsqrt.pop %v275
    %v292 = vmul.f32 %v291, %v275
    %v293 = vmul.f32 %v292, %v291
    %v294 = vmul.f32 0.5, %v293
    %v295 = vsub.f32 1.5, %v294
    %v296 = vmul.f32 %v291, %v295
    %vm297 = vweird.f32 %v275
    %vm298 = vweird.f32 %v291
    %vm299 = vmor %vm297, %vm298
    %v300 = vsel %vm299, %v291, %v296
    %v301 = vrsqrt.pop %v276
    %v302 = vmul.f32 %v301, %v276
    %v303 = vmul.f32 %v302, %v301
    %v304 = vmul.f32 0.5, %v303
    %v305 = vsub.f32 1.5, %v304
    %v306 = vmul.f32 %v301, %v305
    %vm307 = vweird.f32 %v276
    %vm308 = vweird.f32 %v301
    %vm309 = vmor %vm307, %vm308
    %v310 = vsel %vm309, %v301, %v306
    %v311 = vrsqrt.pop %v277
    %v312 = vmul.f32 %v311, %v277
    %v313 = vmul.f32 %v312, %v311
    %v314 = vmul.f32 0.5, %v313
    %v315 = vsub.f32 1.5, %v314
    %v316 = vmul.f32 %v311, %v315
    %vm317 = vweird.f32 %v277
    %vm318 = vweird.f32 %v311
    %vm319 = vmor %vm317, %vm318
    %v320 = vsel %vm319, %v311, %v316
    %v321 = vrsqrt.pop %v278
    %v322 = vmul.f32 %v321, %v278
    %v323 = vmul.f32 %v322, %v321
    %v324 = vmul.f32 0.5, %v323
    %v325 = vsub.f32 1.5, %v324
    %v326 = vmul.f32 %v321, %v325
    %vm327 = vweird.f32 %v278
    %vm328 = vweird.f32 %v321
    %vm329 = vmor %vm327, %vm328
    %v330 = vsel %vm329, %v321, %v326
    %v331 = vrsqrt.pop %v279
    %v332 = vmul.f32 %v331, %v279
    %v333 = vmul.f32 %v332, %v331
    %v334 = vmul.f32 0.5, %v333
    %v335 = vsub.f32 1.5, %v334
    %v336 = vmul.f32 %v331, %v335
    %vm337 = vweird.f32 %v279
    %vm338 = vweird.f32 %v331
    %vm339 = vmor %vm337, %vm338
    %v340 = vsel %vm339, %v331, %v336
    %v341 = vrsqrt.pop %v280
    %v342 = vmul.f32 %v341, %v280
    %v343 = vmul.f32 %v342, %v341
    %v344 = vmul.f32 0.5, %v343
    %v345 = vsub.f32 1.5, %v344
    %v346 = vmul.f32 %v341, %v345
    %vm347 = vweird.f32 %v280
    %vm348 = vweird.f32 %v341
    %vm349 = vmor %vm347, %vm348
    %v350 = vsel %vm349, %v341, %v346
    %v351 = vrsqrt.pop %v281
    %v352 = vmul.f32 %v351, %v281
    %v353 = vmul.f32 %v352, %v351
    %v354 = vmul.f32 0.5, %v353
    %v355 = vsub.f32 1.5, %v354
    %v356 = vmul.f32 %v351, %v355
    %vm357 = vweird.f32 %v281
    %vm358 = vweird.f32 %v351
    %vm359 = vmor %vm357, %vm358
    %v360 = vsel %vm359, %v351, %v356
    %v361 = vrsqrt.pop %v282
    %v362 = vmul.f32 %v361, %v282
    %v363 = vmul.f32 %v362, %v361
    %v364 = vmul.f32 0.5, %v363
    %v365 = vsub.f32 1.5, %v364
    %v366 = vmul.f32 %v361, %v365
    %vm367 = vweird.f32 %v282
    %vm368 = vweird.f32 %v361
    %vm369 = vmor %vm367, %vm368
    %v370 = vsel %vm369, %v361, %v366
    %v371 = vrsqrt.pop %v283
    %v372 = vmul.f32 %v371, %v283
    %v373 = vmul.f32 %v372, %v371
    %v374 = vmul.f32 0.5, %v373
    %v375 = vsub.f32 1.5, %v374
    %v376 = vmul.f32 %v371, %v375
    %vm377 = vweird.f32 %v283
    %vm378 = vweird.f32 %v371
    %vm379 = vmor %vm377, %vm378
    %v380 = vsel %vm379, %v371, %v376
    %v381 = vrsqrt.pop %v284
    %v382 = vmul.f32 %v381, %v284
    %v383 = vmul.f32 %v382, %v381
    %v384 = vmul.f32 0.5, %v383
    %v385 = vsub.f32 1.5, %v384
    %v386 = vmul.f32 %v381, %v385
    %vm387 = vweird.f32 %v284
    %vm388 = vweird.f32 %v381
    %vm389 = vmor %vm387, %vm388
    %v390 = vsel %vm389, %v381, %v386
    %v391 = vrsqrt.pop %v285
    %v392 = vmul.f32 %v391, %v285
    %v393 = vmul.f32 %v392, %v391
    %v394 = vmul.f32 0.5, %v393
    %v395 = vsub.f32 1.5, %v394
    %v396 = vmul.f32 %v391, %v395
    %vm397 = vweird.f32 %v285
    %vm398 = vweird.f32 %v391
    %vm399 = vmor %vm397, %vm398
    %v400 = vsel %vm399, %v391, %v396
    %v401 = vrsqrt.pop %v286
    %v402 = vmul.f32 %v401, %v286
    %v403 = vmul.f32 %v402, %v401
    %v404 = vmul.f32 0.5, %v403
    %v405 = vsub.f32 1.5, %v404
    %v406 = vmul.f32 %v401, %v405
    %vm407 = vweird.f32 %v286
    %vm408 = vweird.f32 %v401
    %vm409 = vmor %vm407, %vm408
    %v410 = vsel %vm409, %v401, %v406
    %v411 = vrsqrt.pop %v287
    %v412 = vmul.f32 %v411, %v287
    %v413 = vmul.f32 %v412, %v411
    %v414 = vmul.f32 0.5, %v413
    %v415 = vsub.f32 1.5, %v414
    %v416 = vmul.f32 %v411, %v415
    %vm417 = vweird.f32 %v287
    %vm418 = vweird.f32 %v411
    %vm419 = vmor %vm417, %vm418
    %v420 = vsel %vm419, %v411, %v416
    %v421 = vrsqrt.pop %v288
    %v422 = vmul.f32 %v421, %v288
    %v423 = vmul.f32 %v422, %v421
    %v424 = vmul.f32 0.5, %v423
    %v425 = vsub.f32 1.5, %v424
    %v426 = vmul.f32 %v421, %v425
    %vm427 = vweird.f32 %v288
    %vm428 = vweird.f32 %v421
    %vm429 = vmor %vm427, %vm428
    %v430 = vsel %vm429, %v421, %v426
    %v431 = vrsqrt.pop %v289
    %v432 = vmul.f32 %v431, %v289
    %v433 = vmul.f32 %v432, %v431
    %v434 = vmul.f32 0.5, %v433
    %v435 = vsub.f32 1.5, %v434
    %v436 = vmul.f32 %v431, %v435
    %vm437 = vweird.f32 %v289
    %vm438 = vweird.f32 %v431
    %vm439 = vmor %vm437, %vm438
    %v440 = vsel %vm439, %v431, %v436
    %v441 = vrsqrt.pop %v290
    %v442 = vmul.f32 %v441, %v290
    %v443 = vmul.f32 %v442, %v441
    %v444 = vmul.f32 0.5, %v443
    %v445 = vsub.f32 1.5, %v444
    %v446 = vmul.f32 %v441, %v445
    %vm447 = vweird.f32 %v290
    %vm448 = vweird.f32 %v441
    %vm449 = vmor %vm447, %vm448
    %v450 = vsel %vm449, %v441, %v446
    %v451 = vmul.f32 %v171, %v300
    %v452 = vmul.f32 %v172, %v310
    %v453 = vmul.f32 %v173, %v320
    %v454 = vmul.f32 %v174, %v330
    %v455 = vmul.f32 %v175, %v340
    %v456 = vmul.f32 %v176, %v350
    %v457 = vmul.f32 %v177, %v360
    %v458 = vmul.f32 %v178, %v370
    %v459 = vmul.f32 %v179, %v380
    %v460 = vmul.f32 %v180, %v390
    %v461 = vmul.f32 %v181, %v400
    %v462 = vmul.f32 %v182, %v410
    %v463 = vmul.f32 %v183, %v420
    %v464 = vmul.f32 %v184, %v430
    %v465 = vmul.f32 %v185, %v440
    %v466 = vmul.f32 %v186, %v450
    %v467 = vld [vmem:[%s4] sm:$0x1]
    %v469 = vperm.slane %v467, 0
    %v471 = vmul.f32 %v451, %v469
    %v472 = vmul.f32 %v452, %v469
    %v473 = vmul.f32 %v453, %v469
    %v474 = vmul.f32 %v454, %v469
    %v475 = vmul.f32 %v455, %v469
    %v476 = vmul.f32 %v456, %v469
    %v477 = vmul.f32 %v457, %v469
    %v478 = vmul.f32 %v458, %v469
    %v479 = vmul.f32 %v459, %v469
    %v480 = vmul.f32 %v460, %v469
    %v481 = vmul.f32 %v461, %v469
    %v482 = vmul.f32 %v462, %v469
    %v483 = vmul.f32 %v463, %v469
    %v484 = vmul.f32 %v464, %v469
    %v485 = vmul.f32 %v465, %v469
    %v486 = vmul.f32 %v466, %v469
    %v487 = vpack.c.bf16 %v472, %v471
    %v488 = vpack.c.bf16 %v474, %v473
    %v489 = vpack.c.bf16 %v476, %v475
    %v490 = vpack.c.bf16 %v478, %v477
    %v491 = vpack.c.bf16 %v480, %v479
    %v492 = vpack.c.bf16 %v482, %v481
    %v493 = vpack.c.bf16 %v484, %v483
    %v494 = vpack.c.bf16 %v486, %v485
    %v495 = vld [vmem:[%s2] sm:$0xf]
    %v496 = vld [vmem:[%s2 + $0x4] sm:$0xf]
    %v497 = vld [vmem:[%s2 + $0x8] sm:$0xf]
    %v498 = vld [vmem:[%s2 + $0xc] sm:$0xf]
    %v503 = vunpack.c.l.b16 %v495
    %v504 = vunpack.c.l.b16 %v496
    %v505 = vunpack.c.l.b16 %v497
    %v506 = vunpack.c.l.b16 %v498
    %v507 = vpack.c.b16 %v504, %v503
    %v508 = vpack.c.b16 %v506, %v505
    %v512 = vsel %vm203, %v487, 0
    %v515 = vsel %vm203, %v488, 0
    %v518 = vsel %vm203, %v489, 0
    %v521 = vsel %vm203, %v490, 0
    %v524 = vsel %vm203, %v491, 0
    %v527 = vsel %vm203, %v492, 0
    %v530 = vsel %vm203, %v493, 0
    %v533 = vsel %vm203, %v494, 0
    %535 = vmatpush.bf16.msra.mxu0 0
    %536 = vmatpush.bf16.msra.mxu0 0
    %537 = vmatpush.bf16.msra.mxu0 0
    %538 = vmatpush.bf16.msra.mxu0 0
    %539 = vmatpush.bf16.msra.mxu0 0
    %540 = vmatpush.bf16.msra.mxu0 0
    %541 = vmatpush.bf16.msra.mxu0 %v508
    %542 = vmatpush.bf16.msra.mxu0 %v507
    %543 = vmatmul.bf16.gmra.mxu0 %v512
    %v544 = vpop.f32.mrf.mxu0
    %v545 = vadd.f32 0.0, %v544
    %v546 = vpop.f32.mrf.mxu0
    %v547 = vadd.f32 0.0, %v546
    %548 = vmatmul.bf16.gmra.mxu0 %v515
    %v549 = vpop.f32.mrf.mxu0
    %v550 = vadd.f32 0.0, %v549
    %v551 = vpop.f32.mrf.mxu0
    %v552 = vadd.f32 0.0, %v551
    %553 = vmatmul.bf16.gmra.mxu0 %v518
    %v554 = vpop.f32.mrf.mxu0
    %v555 = vadd.f32 0.0, %v554
    %v556 = vpop.f32.mrf.mxu0
    %v557 = vadd.f32 0.0, %v556
    %558 = vmatmul.bf16.gmra.mxu0 %v521
    %v559 = vpop.f32.mrf.mxu0
    %v560 = vadd.f32 0.0, %v559
    %v561 = vpop.f32.mrf.mxu0
    %v562 = vadd.f32 0.0, %v561
    %563 = vmatmul.bf16.gmra.mxu0 %v524
    %v564 = vpop.f32.mrf.mxu0
    %v565 = vadd.f32 0.0, %v564
    %v566 = vpop.f32.mrf.mxu0
    %v567 = vadd.f32 0.0, %v566
    %568 = vmatmul.bf16.gmra.mxu0 %v527
    %v569 = vpop.f32.mrf.mxu0
    %v570 = vadd.f32 0.0, %v569
    %v571 = vpop.f32.mrf.mxu0
    %v572 = vadd.f32 0.0, %v571
    %573 = vmatmul.bf16.gmra.mxu0 %v530
    %v574 = vpop.f32.mrf.mxu0
    %v575 = vadd.f32 0.0, %v574
    %v576 = vpop.f32.mrf.mxu0
    %v577 = vadd.f32 0.0, %v576
    %578 = vmatmul.bf16.gmra.mxu0 %v533
    %v579 = vpop.f32.mrf.mxu0
    %v580 = vadd.f32 0.0, %v579
    %v581 = vpop.f32.mrf.mxu0
    %v582 = vadd.f32 0.0, %v581
    %583 = vdwg.mxu0
    %v584 = vpack.c.bf16 %v545, %v545
    %v585 = vpack.c.bf16 %v547, %v547
    %v586 = vpack.c.bf16 %v550, %v550
    %v587 = vpack.c.bf16 %v552, %v552
    %v588 = vpack.c.bf16 %v555, %v555
    %v589 = vpack.c.bf16 %v557, %v557
    %v590 = vpack.c.bf16 %v560, %v560
    %v591 = vpack.c.bf16 %v562, %v562
    %v592 = vpack.c.bf16 %v565, %v565
    %v593 = vpack.c.bf16 %v567, %v567
    %v594 = vpack.c.bf16 %v570, %v570
    %v595 = vpack.c.bf16 %v572, %v572
    %v596 = vpack.c.bf16 %v575, %v575
    %v597 = vpack.c.bf16 %v577, %v577
    %v598 = vpack.c.bf16 %v580, %v580
    %v599 = vpack.c.bf16 %v582, %v582
    %v602 = vunpack.c.l.b16 %v584
    %v603 = vunpack.c.l.b16 %v585
    %v604 = vpack.c.b16 %v603, %v602
    %605 = vrot.lane.b32.xlu0 %v604, 96
    %v606 = vpop.permute.xlu0 %605
    %v608 = vsel %vm203, %v604, 0
    %v611 = vsel %vm203, %v606, 0
    %613 = vmatpush.bf16.xpose.msra.mxu0 0
    %614 = vmatpush.bf16.xpose.msra.mxu0 0
    %615 = vmatpush.bf16.xpose.msra.mxu0 0
    %616 = vmatpush.bf16.xpose.msra.mxu0 0
    %617 = vmatpush.bf16.xpose.msra.mxu0 0
    %618 = vmatpush.bf16.xpose.msra.mxu0 0
    %619 = vmatpush.bf16.xpose.msra.mxu0 0
    %620 = vmatpush.bf16.xpose.msra.mxu0 %v611
    %621 = vmatmul.bf16.gmra.mxu0 %v608
    %v622 = vpop.f32.mrf.mxu0
    %v623 = vadd.f32 0.0, %v622
    %v624 = vpop.f32.mrf.mxu0
    %v625 = vadd.f32 0.0, %v624
    %626 = vdwg.mxu0
    %v629 = vunpack.c.l.b16 %v586
    %v630 = vunpack.c.l.b16 %v587
    %v631 = vpack.c.b16 %v630, %v629
    %632 = vrot.lane.b32.xlu0 %v631, 96
    %v633 = vpop.permute.xlu0 %632
    %v635 = vsel %vm203, %v631, 0
    %v638 = vsel %vm203, %v633, 0
    %640 = vmatpush.bf16.xpose.msra.mxu0 0
    %641 = vmatpush.bf16.xpose.msra.mxu0 0
    %642 = vmatpush.bf16.xpose.msra.mxu0 0
    %643 = vmatpush.bf16.xpose.msra.mxu0 0
    %644 = vmatpush.bf16.xpose.msra.mxu0 0
    %645 = vmatpush.bf16.xpose.msra.mxu0 0
    %646 = vmatpush.bf16.xpose.msra.mxu0 0
    %647 = vmatpush.bf16.xpose.msra.mxu0 %v638
    %648 = vmatmul.bf16.gmra.mxu0 %v635
    %v649 = vpop.f32.mrf.mxu0
    %v650 = vadd.f32 0.0, %v649
    %v651 = vpop.f32.mrf.mxu0
    %v652 = vadd.f32 0.0, %v651
    %653 = vdwg.mxu0
    %v656 = vunpack.c.l.b16 %v588
    %v657 = vunpack.c.l.b16 %v589
    %v658 = vpack.c.b16 %v657, %v656
    %659 = vrot.lane.b32.xlu0 %v658, 96
    %v660 = vpop.permute.xlu0 %659
    %v662 = vsel %vm203, %v658, 0
    %v665 = vsel %vm203, %v660, 0
    %667 = vmatpush.bf16.xpose.msra.mxu0 0
    %668 = vmatpush.bf16.xpose.msra.mxu0 0
    %669 = vmatpush.bf16.xpose.msra.mxu0 0
    %670 = vmatpush.bf16.xpose.msra.mxu0 0
    %671 = vmatpush.bf16.xpose.msra.mxu0 0
    %672 = vmatpush.bf16.xpose.msra.mxu0 0
    %673 = vmatpush.bf16.xpose.msra.mxu0 0
    %674 = vmatpush.bf16.xpose.msra.mxu0 %v665
    %675 = vmatmul.bf16.gmra.mxu0 %v662
    %v676 = vpop.f32.mrf.mxu0
    %v677 = vadd.f32 0.0, %v676
    %v678 = vpop.f32.mrf.mxu0
    %v679 = vadd.f32 0.0, %v678
    %680 = vdwg.mxu0
    %v683 = vunpack.c.l.b16 %v590
    %v684 = vunpack.c.l.b16 %v591
    %v685 = vpack.c.b16 %v684, %v683
    %686 = vrot.lane.b32.xlu0 %v685, 96
    %v687 = vpop.permute.xlu0 %686
    %v689 = vsel %vm203, %v685, 0
    %v692 = vsel %vm203, %v687, 0
    %694 = vmatpush.bf16.xpose.msra.mxu0 0
    %695 = vmatpush.bf16.xpose.msra.mxu0 0
    %696 = vmatpush.bf16.xpose.msra.mxu0 0
    %697 = vmatpush.bf16.xpose.msra.mxu0 0
    %698 = vmatpush.bf16.xpose.msra.mxu0 0
    %699 = vmatpush.bf16.xpose.msra.mxu0 0
    %700 = vmatpush.bf16.xpose.msra.mxu0 0
    %701 = vmatpush.bf16.xpose.msra.mxu0 %v692
    %702 = vmatmul.bf16.gmra.mxu0 %v689
    %v703 = vpop.f32.mrf.mxu0
    %v704 = vadd.f32 0.0, %v703
    %v705 = vpop.f32.mrf.mxu0
    %v706 = vadd.f32 0.0, %v705
    %707 = vdwg.mxu0
    %v710 = vunpack.c.l.b16 %v592
    %v711 = vunpack.c.l.b16 %v593
    %v712 = vpack.c.b16 %v711, %v710
    %713 = vrot.lane.b32.xlu0 %v712, 96
    %v714 = vpop.permute.xlu0 %713
    %v716 = vsel %vm203, %v712, 0
    %v719 = vsel %vm203, %v714, 0
    %721 = vmatpush.bf16.xpose.msra.mxu0 0
    %722 = vmatpush.bf16.xpose.msra.mxu0 0
    %723 = vmatpush.bf16.xpose.msra.mxu0 0
    %724 = vmatpush.bf16.xpose.msra.mxu0 0
    %725 = vmatpush.bf16.xpose.msra.mxu0 0
    %726 = vmatpush.bf16.xpose.msra.mxu0 0
    %727 = vmatpush.bf16.xpose.msra.mxu0 0
    %728 = vmatpush.bf16.xpose.msra.mxu0 %v719
    %729 = vmatmul.bf16.gmra.mxu0 %v716
    %v730 = vpop.f32.mrf.mxu0
    %v731 = vadd.f32 0.0, %v730
    %v732 = vpop.f32.mrf.mxu0
    %v733 = vadd.f32 0.0, %v732
    %734 = vdwg.mxu0
    %v737 = vunpack.c.l.b16 %v594
    %v738 = vunpack.c.l.b16 %v595
    %v739 = vpack.c.b16 %v738, %v737
    %740 = vrot.lane.b32.xlu0 %v739, 96
    %v741 = vpop.permute.xlu0 %740
    %v743 = vsel %vm203, %v739, 0
    %v746 = vsel %vm203, %v741, 0
    %748 = vmatpush.bf16.xpose.msra.mxu0 0
    %749 = vmatpush.bf16.xpose.msra.mxu0 0
    %750 = vmatpush.bf16.xpose.msra.mxu0 0
    %751 = vmatpush.bf16.xpose.msra.mxu0 0
    %752 = vmatpush.bf16.xpose.msra.mxu0 0
    %753 = vmatpush.bf16.xpose.msra.mxu0 0
    %754 = vmatpush.bf16.xpose.msra.mxu0 0
    %755 = vmatpush.bf16.xpose.msra.mxu0 %v746
    %756 = vmatmul.bf16.gmra.mxu0 %v743
    %v757 = vpop.f32.mrf.mxu0
    %v758 = vadd.f32 0.0, %v757
    %v759 = vpop.f32.mrf.mxu0
    %v760 = vadd.f32 0.0, %v759
    %761 = vdwg.mxu0
    %v764 = vunpack.c.l.b16 %v596
    %v765 = vunpack.c.l.b16 %v597
    %v766 = vpack.c.b16 %v765, %v764
    %767 = vrot.lane.b32.xlu0 %v766, 96
    %v768 = vpop.permute.xlu0 %767
    %v770 = vsel %vm203, %v766, 0
    %v773 = vsel %vm203, %v768, 0
    %775 = vmatpush.bf16.xpose.msra.mxu0 0
    %776 = vmatpush.bf16.xpose.msra.mxu0 0
    %777 = vmatpush.bf16.xpose.msra.mxu0 0
    %778 = vmatpush.bf16.xpose.msra.mxu0 0
    %779 = vmatpush.bf16.xpose.msra.mxu0 0
    %780 = vmatpush.bf16.xpose.msra.mxu0 0
    %781 = vmatpush.bf16.xpose.msra.mxu0 0
    %782 = vmatpush.bf16.xpose.msra.mxu0 %v773
    %783 = vmatmul.bf16.gmra.mxu0 %v770
    %v784 = vpop.f32.mrf.mxu0
    %v785 = vadd.f32 0.0, %v784
    %v786 = vpop.f32.mrf.mxu0
    %v787 = vadd.f32 0.0, %v786
    %788 = vdwg.mxu0
    %v791 = vunpack.c.l.b16 %v598
    %v792 = vunpack.c.l.b16 %v599
    %v793 = vpack.c.b16 %v792, %v791
    %794 = vrot.lane.b32.xlu0 %v793, 96
    %v795 = vpop.permute.xlu0 %794
    %v797 = vsel %vm203, %v793, 0
    %v800 = vsel %vm203, %v795, 0
    %802 = vmatpush.bf16.xpose.msra.mxu0 0
    %803 = vmatpush.bf16.xpose.msra.mxu0 0
    %804 = vmatpush.bf16.xpose.msra.mxu0 0
    %805 = vmatpush.bf16.xpose.msra.mxu0 0
    %806 = vmatpush.bf16.xpose.msra.mxu0 0
    %807 = vmatpush.bf16.xpose.msra.mxu0 0
    %808 = vmatpush.bf16.xpose.msra.mxu0 0
    %809 = vmatpush.bf16.xpose.msra.mxu0 %v800
    %810 = vmatmul.bf16.gmra.mxu0 %v797
    %v811 = vpop.f32.mrf.mxu0
    %v812 = vadd.f32 0.0, %v811
    %v813 = vpop.f32.mrf.mxu0
    %v814 = vadd.f32 0.0, %v813
    %815 = vdwg.mxu0
    %v816 = vmul.f32 %v623, 0.17677669
    %v817 = vmul.f32 %v625, 0.17677669
    %v818 = vmul.f32 %v650, 0.17677669
    %v819 = vmul.f32 %v652, 0.17677669
    %v820 = vmul.f32 %v677, 0.17677669
    %v821 = vmul.f32 %v679, 0.17677669
    %v822 = vmul.f32 %v704, 0.17677669
    %v823 = vmul.f32 %v706, 0.17677669
    %v824 = vmul.f32 %v731, 0.17677669
    %v825 = vmul.f32 %v733, 0.17677669
    %v826 = vmul.f32 %v758, 0.17677669
    %v827 = vmul.f32 %v760, 0.17677669
    %v828 = vmul.f32 %v785, 0.17677669
    %v829 = vmul.f32 %v787, 0.17677669
    %v830 = vmul.f32 %v812, 0.17677669
    %v831 = vmul.f32 %v814, 0.17677669
    %v832 = vlaneseq
    %v833 = vand.u32 %v832, 127
    %vm834 = vcmp.lt.s32.totalorder %v833, 16
    %v835 = vsel %vm834, 1, 0
    %vm836 = vcmp.eq.s32.totalorder %v835, 1
    %v837 = vsel %vm836, %v816, -1e+30
    %v838 = vsel %vm836, %v817, -1e+30
    %v839 = vsel %vm836, %v818, -1e+30
    %v840 = vsel %vm836, %v819, -1e+30
    %v841 = vsel %vm836, %v820, -1e+30
    %v842 = vsel %vm836, %v821, -1e+30
    %v843 = vsel %vm836, %v822, -1e+30
    %v844 = vsel %vm836, %v823, -1e+30
    %v845 = vsel %vm836, %v824, -1e+30
    %v846 = vsel %vm836, %v825, -1e+30
    %v847 = vsel %vm836, %v826, -1e+30
    %v848 = vsel %vm836, %v827, -1e+30
    %v849 = vsel %vm836, %v828, -1e+30
    %v850 = vsel %vm836, %v829, -1e+30
    %v851 = vsel %vm836, %v830, -1e+30
    %v852 = vsel %vm836, %v831, -1e+30
    %v853 = vsel %vm42, %v837, -inf
    %854 = vmax.xlane.f32.xlu0 %v853
    %v855 = vpop.xlane.xlu0 %854
    %v856 = vsel %vm42, %v838, -inf
    %857 = vmax.xlane.f32.xlu0 %v856
    %v858 = vpop.xlane.xlu0 %857
    %v859 = vsel %vm42, %v839, -inf
    %860 = vmax.xlane.f32.xlu0 %v859
    %v861 = vpop.xlane.xlu0 %860
    %v862 = vsel %vm42, %v840, -inf
    %863 = vmax.xlane.f32.xlu0 %v862
    %v864 = vpop.xlane.xlu0 %863
    %v865 = vsel %vm42, %v841, -inf
    %866 = vmax.xlane.f32.xlu0 %v865
    %v867 = vpop.xlane.xlu0 %866
    %v868 = vsel %vm42, %v842, -inf
    %869 = vmax.xlane.f32.xlu0 %v868
    %v870 = vpop.xlane.xlu0 %869
    %v871 = vsel %vm42, %v843, -inf
    %872 = vmax.xlane.f32.xlu0 %v871
    %v873 = vpop.xlane.xlu0 %872
    %v874 = vsel %vm42, %v844, -inf
    %875 = vmax.xlane.f32.xlu0 %v874
    %v876 = vpop.xlane.xlu0 %875
    %v877 = vsel %vm42, %v845, -inf
    %878 = vmax.xlane.f32.xlu0 %v877
    %v879 = vpop.xlane.xlu0 %878
    %v880 = vsel %vm42, %v846, -inf
    %881 = vmax.xlane.f32.xlu0 %v880
    %v882 = vpop.xlane.xlu0 %881
    %v883 = vsel %vm42, %v847, -inf
    %884 = vmax.xlane.f32.xlu0 %v883
    %v885 = vpop.xlane.xlu0 %884
    %v886 = vsel %vm42, %v848, -inf
    %887 = vmax.xlane.f32.xlu0 %v886
    %v888 = vpop.xlane.xlu0 %887
    %v889 = vsel %vm42, %v849, -inf
    %890 = vmax.xlane.f32.xlu0 %v889
    %v891 = vpop.xlane.xlu0 %890
    %v892 = vsel %vm42, %v850, -inf
    %893 = vmax.xlane.f32.xlu0 %v892
    %v894 = vpop.xlane.xlu0 %893
    %v895 = vsel %vm42, %v851, -inf
    %896 = vmax.xlane.f32.xlu0 %v895
    %v897 = vpop.xlane.xlu0 %896
    %v898 = vsel %vm42, %v852, -inf
    %899 = vmax.xlane.f32.xlu0 %v898
    %v900 = vpop.xlane.xlu0 %899
    %v901 = vsub.f32 %v837, %v855
    %v902 = vsub.f32 %v838, %v858
    %v903 = vsub.f32 %v839, %v861
    %v904 = vsub.f32 %v840, %v864
    %v905 = vsub.f32 %v841, %v867
    %v906 = vsub.f32 %v842, %v870
    %v907 = vsub.f32 %v843, %v873
    %v908 = vsub.f32 %v844, %v876
    %v909 = vsub.f32 %v845, %v879
    %v910 = vsub.f32 %v846, %v882
    %v911 = vsub.f32 %v847, %v885
    %v912 = vsub.f32 %v848, %v888
    %v913 = vsub.f32 %v849, %v891
    %v914 = vsub.f32 %v850, %v894
    %v915 = vsub.f32 %v851, %v897
    %v916 = vsub.f32 %v852, %v900
    %v917 = vmul.f32 %v901, 1.442695
    %v918 = vpow.pop %v917
    %v919 = vmul.f32 %v902, 1.442695
    %v920 = vpow.pop %v919
    %v921 = vmul.f32 %v903, 1.442695
    %v922 = vpow.pop %v921
    %v923 = vmul.f32 %v904, 1.442695
    %v924 = vpow.pop %v923
    %v925 = vmul.f32 %v905, 1.442695
    %v926 = vpow.pop %v925
    %v927 = vmul.f32 %v906, 1.442695
    %v928 = vpow.pop %v927
    %v929 = vmul.f32 %v907, 1.442695
    %v930 = vpow.pop %v929
    %v931 = vmul.f32 %v908, 1.442695
    %v932 = vpow.pop %v931
    %v933 = vmul.f32 %v909, 1.442695
    %v934 = vpow.pop %v933
    %v935 = vmul.f32 %v910, 1.442695
    %v936 = vpow.pop %v935
    %v937 = vmul.f32 %v911, 1.442695
    %v938 = vpow.pop %v937
    %v939 = vmul.f32 %v912, 1.442695
    %v940 = vpow.pop %v939
    %v941 = vmul.f32 %v913, 1.442695
    %v942 = vpow.pop %v941
    %v943 = vmul.f32 %v914, 1.442695
    %v944 = vpow.pop %v943
    %v945 = vmul.f32 %v915, 1.442695
    %v946 = vpow.pop %v945
    %v947 = vmul.f32 %v916, 1.442695
    %v948 = vpow.pop %v947
    %v949 = vsel %vm42, %v918, 0.0
    %950 = vadd.xlane.f32.xlu0 %v949
    %v951 = vpop.xlane.xlu0 %950
    %v952 = vsel %vm42, %v920, 0.0
    %953 = vadd.xlane.f32.xlu0 %v952
    %v954 = vpop.xlane.xlu0 %953
    %v955 = vsel %vm42, %v922, 0.0
    %956 = vadd.xlane.f32.xlu0 %v955
    %v957 = vpop.xlane.xlu0 %956
    %v958 = vsel %vm42, %v924, 0.0
    %959 = vadd.xlane.f32.xlu0 %v958
    %v960 = vpop.xlane.xlu0 %959
    %v961 = vsel %vm42, %v926, 0.0
    %962 = vadd.xlane.f32.xlu0 %v961
    %v963 = vpop.xlane.xlu0 %962
    %v964 = vsel %vm42, %v928, 0.0
    %965 = vadd.xlane.f32.xlu0 %v964
    %v966 = vpop.xlane.xlu0 %965
    %v967 = vsel %vm42, %v930, 0.0
    %968 = vadd.xlane.f32.xlu0 %v967
    %v969 = vpop.xlane.xlu0 %968
    %v970 = vsel %vm42, %v932, 0.0
    %971 = vadd.xlane.f32.xlu0 %v970
    %v972 = vpop.xlane.xlu0 %971
    %v973 = vsel %vm42, %v934, 0.0
    %974 = vadd.xlane.f32.xlu0 %v973
    %v975 = vpop.xlane.xlu0 %974
    %v976 = vsel %vm42, %v936, 0.0
    %977 = vadd.xlane.f32.xlu0 %v976
    %v978 = vpop.xlane.xlu0 %977
    %v979 = vsel %vm42, %v938, 0.0
    %980 = vadd.xlane.f32.xlu0 %v979
    %v981 = vpop.xlane.xlu0 %980
    %v982 = vsel %vm42, %v940, 0.0
    %983 = vadd.xlane.f32.xlu0 %v982
    %v984 = vpop.xlane.xlu0 %983
    %v985 = vsel %vm42, %v942, 0.0
    %986 = vadd.xlane.f32.xlu0 %v985
    %v987 = vpop.xlane.xlu0 %986
    %v988 = vsel %vm42, %v944, 0.0
    %989 = vadd.xlane.f32.xlu0 %v988
    %v990 = vpop.xlane.xlu0 %989
    %v991 = vsel %vm42, %v946, 0.0
    %992 = vadd.xlane.f32.xlu0 %v991
    %v993 = vpop.xlane.xlu0 %992
    %v994 = vsel %vm42, %v948, 0.0
    %995 = vadd.xlane.f32.xlu0 %v994
    %v996 = vpop.xlane.xlu0 %995
    %v997 = vrcp.pop %v951
    %v998 = vrcp.pop %v954
    %v999 = vrcp.pop %v957
    %v1000 = vrcp.pop %v960
    %v1001 = vrcp.pop %v963
    %v1002 = vrcp.pop %v966
    %v1003 = vrcp.pop %v969
    %v1004 = vrcp.pop %v972
    %v1005 = vrcp.pop %v975
    %v1006 = vrcp.pop %v978
    %v1007 = vrcp.pop %v981
    %v1008 = vrcp.pop %v984
    %v1009 = vrcp.pop %v987
    %v1010 = vrcp.pop %v990
    %v1011 = vrcp.pop %v993
    %v1012 = vrcp.pop %v996
    %v1013 = vmul.f32 %v918, %v997
    %v1014 = vmul.f32 %v920, %v998
    %v1015 = vmul.f32 %v922, %v999
    %v1016 = vmul.f32 %v924, %v1000
    %v1017 = vmul.f32 %v926, %v1001
    %v1018 = vmul.f32 %v928, %v1002
    %v1019 = vmul.f32 %v930, %v1003
    %v1020 = vmul.f32 %v932, %v1004
    %v1021 = vmul.f32 %v934, %v1005
    %v1022 = vmul.f32 %v936, %v1006
    %v1023 = vmul.f32 %v938, %v1007
    %v1024 = vmul.f32 %v940, %v1008
    %v1025 = vmul.f32 %v942, %v1009
    %v1026 = vmul.f32 %v944, %v1010
    %v1027 = vmul.f32 %v946, %v1011
    %v1028 = vmul.f32 %v948, %v1012
    %v1029 = vpack.c.bf16 %v1013, %v1013
    %v1030 = vpack.c.bf16 %v1014, %v1014
    %v1031 = vpack.c.bf16 %v1015, %v1015
    %v1032 = vpack.c.bf16 %v1016, %v1016
    %v1033 = vpack.c.bf16 %v1017, %v1017
    %v1034 = vpack.c.bf16 %v1018, %v1018
    %v1035 = vpack.c.bf16 %v1019, %v1019
    %v1036 = vpack.c.bf16 %v1020, %v1020
    %v1037 = vpack.c.bf16 %v1021, %v1021
    %v1038 = vpack.c.bf16 %v1022, %v1022
    %v1039 = vpack.c.bf16 %v1023, %v1023
    %v1040 = vpack.c.bf16 %v1024, %v1024
    %v1041 = vpack.c.bf16 %v1025, %v1025
    %v1042 = vpack.c.bf16 %v1026, %v1026
    %v1043 = vpack.c.bf16 %v1027, %v1027
    %v1044 = vpack.c.bf16 %v1028, %v1028
    %v1047 = vunpack.c.l.b16 %v1029
    %v1048 = vunpack.c.l.b16 %v1030
    %v1049 = vpack.c.b16 %v1048, %v1047
    %1050 = vrot.lane.b32.xlu0 %v604, 64
    %v1051 = vpop.permute.xlu0 %1050
    %v1054 = vsel %vm42, %v1049, 0
    %1056 = vmatpush.bf16.msra.mxu0 0
    %1057 = vmatpush.bf16.msra.mxu0 0
    %1058 = vmatpush.bf16.msra.mxu0 0
    %1059 = vmatpush.bf16.msra.mxu0 0
    %1060 = vmatpush.bf16.msra.mxu0 0
    %1061 = vmatpush.bf16.msra.mxu0 0
    %1062 = vmatpush.bf16.msra.mxu0 0
    %1063 = vmatpush.bf16.msra.mxu0 %v1051
    %1064 = vmatmul.bf16.gmra.mxu0 %v1054
    %v1065 = vpop.f32.mrf.mxu0
    %v1066 = vadd.f32 0.0, %v1065
    %v1067 = vpop.f32.mrf.mxu0
    %v1068 = vadd.f32 0.0, %v1067
    %1069 = vdwg.mxu0
    %v1072 = vunpack.c.l.b16 %v1031
    %v1073 = vunpack.c.l.b16 %v1032
    %v1074 = vpack.c.b16 %v1073, %v1072
    %1075 = vrot.lane.b32.xlu0 %v631, 64
    %v1076 = vpop.permute.xlu0 %1075
    %v1079 = vsel %vm42, %v1074, 0
    %1081 = vmatpush.bf16.msra.mxu0 0
    %1082 = vmatpush.bf16.msra.mxu0 0
    %1083 = vmatpush.bf16.msra.mxu0 0
    %1084 = vmatpush.bf16.msra.mxu0 0
    %1085 = vmatpush.bf16.msra.mxu0 0
    %1086 = vmatpush.bf16.msra.mxu0 0
    %1087 = vmatpush.bf16.msra.mxu0 0
    %1088 = vmatpush.bf16.msra.mxu0 %v1076
    %1089 = vmatmul.bf16.gmra.mxu0 %v1079
    %v1090 = vpop.f32.mrf.mxu0
    %v1091 = vadd.f32 0.0, %v1090
    %v1092 = vpop.f32.mrf.mxu0
    %v1093 = vadd.f32 0.0, %v1092
    %1094 = vdwg.mxu0
    %v1097 = vunpack.c.l.b16 %v1033
    %v1098 = vunpack.c.l.b16 %v1034
    %v1099 = vpack.c.b16 %v1098, %v1097
    %1100 = vrot.lane.b32.xlu0 %v658, 64
    %v1101 = vpop.permute.xlu0 %1100
    %v1104 = vsel %vm42, %v1099, 0
    %1106 = vmatpush.bf16.msra.mxu0 0
    %1107 = vmatpush.bf16.msra.mxu0 0
    %1108 = vmatpush.bf16.msra.mxu0 0
    %1109 = vmatpush.bf16.msra.mxu0 0
    %1110 = vmatpush.bf16.msra.mxu0 0
    %1111 = vmatpush.bf16.msra.mxu0 0
    %1112 = vmatpush.bf16.msra.mxu0 0
    %1113 = vmatpush.bf16.msra.mxu0 %v1101
    %1114 = vmatmul.bf16.gmra.mxu0 %v1104
    %v1115 = vpop.f32.mrf.mxu0
    %v1116 = vadd.f32 0.0, %v1115
    %v1117 = vpop.f32.mrf.mxu0
    %v1118 = vadd.f32 0.0, %v1117
    %1119 = vdwg.mxu0
    %v1122 = vunpack.c.l.b16 %v1035
    %v1123 = vunpack.c.l.b16 %v1036
    %v1124 = vpack.c.b16 %v1123, %v1122
    %1125 = vrot.lane.b32.xlu0 %v685, 64
    %v1126 = vpop.permute.xlu0 %1125
    %v1129 = vsel %vm42, %v1124, 0
    %1131 = vmatpush.bf16.msra.mxu0 0
    %1132 = vmatpush.bf16.msra.mxu0 0
    %1133 = vmatpush.bf16.msra.mxu0 0
    %1134 = vmatpush.bf16.msra.mxu0 0
    %1135 = vmatpush.bf16.msra.mxu0 0
    %1136 = vmatpush.bf16.msra.mxu0 0
    %1137 = vmatpush.bf16.msra.mxu0 0
    %1138 = vmatpush.bf16.msra.mxu0 %v1126
    %1139 = vmatmul.bf16.gmra.mxu0 %v1129
    %v1140 = vpop.f32.mrf.mxu0
    %v1141 = vadd.f32 0.0, %v1140
    %v1142 = vpop.f32.mrf.mxu0
    %v1143 = vadd.f32 0.0, %v1142
    %1144 = vdwg.mxu0
    %v1147 = vunpack.c.l.b16 %v1037
    %v1148 = vunpack.c.l.b16 %v1038
    %v1149 = vpack.c.b16 %v1148, %v1147
    %1150 = vrot.lane.b32.xlu0 %v712, 64
    %v1151 = vpop.permute.xlu0 %1150
    %v1154 = vsel %vm42, %v1149, 0
    %1156 = vmatpush.bf16.msra.mxu0 0
    %1157 = vmatpush.bf16.msra.mxu0 0
    %1158 = vmatpush.bf16.msra.mxu0 0
    %1159 = vmatpush.bf16.msra.mxu0 0
    %1160 = vmatpush.bf16.msra.mxu0 0
    %1161 = vmatpush.bf16.msra.mxu0 0
    %1162 = vmatpush.bf16.msra.mxu0 0
    %1163 = vmatpush.bf16.msra.mxu0 %v1151
    %1164 = vmatmul.bf16.gmra.mxu0 %v1154
    %v1165 = vpop.f32.mrf.mxu0
    %v1166 = vadd.f32 0.0, %v1165
    %v1167 = vpop.f32.mrf.mxu0
    %v1168 = vadd.f32 0.0, %v1167
    %1169 = vdwg.mxu0
    %v1172 = vunpack.c.l.b16 %v1039
    %v1173 = vunpack.c.l.b16 %v1040
    %v1174 = vpack.c.b16 %v1173, %v1172
    %1175 = vrot.lane.b32.xlu0 %v739, 64
    %v1176 = vpop.permute.xlu0 %1175
    %v1179 = vsel %vm42, %v1174, 0
    %1181 = vmatpush.bf16.msra.mxu0 0
    %1182 = vmatpush.bf16.msra.mxu0 0
    %1183 = vmatpush.bf16.msra.mxu0 0
    %1184 = vmatpush.bf16.msra.mxu0 0
    %1185 = vmatpush.bf16.msra.mxu0 0
    %1186 = vmatpush.bf16.msra.mxu0 0
    %1187 = vmatpush.bf16.msra.mxu0 0
    %1188 = vmatpush.bf16.msra.mxu0 %v1176
    %1189 = vmatmul.bf16.gmra.mxu0 %v1179
    %v1190 = vpop.f32.mrf.mxu0
    %v1191 = vadd.f32 0.0, %v1190
    %v1192 = vpop.f32.mrf.mxu0
    %v1193 = vadd.f32 0.0, %v1192
    %1194 = vdwg.mxu0
    %v1197 = vunpack.c.l.b16 %v1041
    %v1198 = vunpack.c.l.b16 %v1042
    %v1199 = vpack.c.b16 %v1198, %v1197
    %1200 = vrot.lane.b32.xlu0 %v766, 64
    %v1201 = vpop.permute.xlu0 %1200
    %v1204 = vsel %vm42, %v1199, 0
    %1206 = vmatpush.bf16.msra.mxu0 0
    %1207 = vmatpush.bf16.msra.mxu0 0
    %1208 = vmatpush.bf16.msra.mxu0 0
    %1209 = vmatpush.bf16.msra.mxu0 0
    %1210 = vmatpush.bf16.msra.mxu0 0
    %1211 = vmatpush.bf16.msra.mxu0 0
    %1212 = vmatpush.bf16.msra.mxu0 0
    %1213 = vmatpush.bf16.msra.mxu0 %v1201
    %1214 = vmatmul.bf16.gmra.mxu0 %v1204
    %v1215 = vpop.f32.mrf.mxu0
    %v1216 = vadd.f32 0.0, %v1215
    %v1217 = vpop.f32.mrf.mxu0
    %v1218 = vadd.f32 0.0, %v1217
    %1219 = vdwg.mxu0
    %v1222 = vunpack.c.l.b16 %v1043
    %v1223 = vunpack.c.l.b16 %v1044
    %v1224 = vpack.c.b16 %v1223, %v1222
    %1225 = vrot.lane.b32.xlu0 %v793, 64
    %v1226 = vpop.permute.xlu0 %1225
    %v1229 = vsel %vm42, %v1224, 0
    %1231 = vmatpush.bf16.msra.mxu0 0
    %1232 = vmatpush.bf16.msra.mxu0 0
    %1233 = vmatpush.bf16.msra.mxu0 0
    %1234 = vmatpush.bf16.msra.mxu0 0
    %1235 = vmatpush.bf16.msra.mxu0 0
    %1236 = vmatpush.bf16.msra.mxu0 0
    %1237 = vmatpush.bf16.msra.mxu0 0
    %1238 = vmatpush.bf16.msra.mxu0 %v1226
    %1239 = vmatmul.bf16.gmra.mxu0 %v1229
    %v1240 = vpop.f32.mrf.mxu0
    %v1241 = vadd.f32 0.0, %v1240
    %v1242 = vpop.f32.mrf.mxu0
    %v1243 = vadd.f32 0.0, %v1242
    %1244 = vdwg.mxu0
    %v1245 = vpack.c.bf16 %v1068, %v1066
    %v1246 = vpack.c.bf16 %v1093, %v1091
    %v1247 = vpack.c.bf16 %v1118, %v1116
    %v1248 = vpack.c.bf16 %v1143, %v1141
    %v1249 = vpack.c.bf16 %v1168, %v1166
    %v1250 = vpack.c.bf16 %v1193, %v1191
    %v1251 = vpack.c.bf16 %v1218, %v1216
    %v1252 = vpack.c.bf16 %v1243, %v1241
    %v1253 = vld [vmem:[%s3] sm:$0xf]
    %v1254 = vld [vmem:[%s3 + $0x4] sm:$0xf]
    %v1255 = vld [vmem:[%s3 + $0x8] sm:$0xf]
    %v1256 = vld [vmem:[%s3 + $0xc] sm:$0xf]
    %v1261 = vunpack.c.l.b16 %v1253
    %v1262 = vunpack.c.l.b16 %v1254
    %v1263 = vunpack.c.l.b16 %v1255
    %v1264 = vunpack.c.l.b16 %v1256
    %v1265 = vpack.c.b16 %v1262, %v1261
    %v1266 = vpack.c.b16 %v1264, %v1263
    %v1270 = vsel %vm203, %v1245, 0
    %v1273 = vsel %vm203, %v1246, 0
    %v1276 = vsel %vm203, %v1247, 0
    %v1279 = vsel %vm203, %v1248, 0
    %v1282 = vsel %vm203, %v1249, 0
    %v1285 = vsel %vm203, %v1250, 0
    %v1288 = vsel %vm203, %v1251, 0
    %v1291 = vsel %vm203, %v1252, 0
    %1293 = vmatpush.bf16.msra.mxu0 0
    %1294 = vmatpush.bf16.msra.mxu0 0
    %1295 = vmatpush.bf16.msra.mxu0 0
    %1296 = vmatpush.bf16.msra.mxu0 0
    %1297 = vmatpush.bf16.msra.mxu0 0
    %1298 = vmatpush.bf16.msra.mxu0 0
    %1299 = vmatpush.bf16.msra.mxu0 %v1266
    %1300 = vmatpush.bf16.msra.mxu0 %v1265
    %1301 = vmatmul.bf16.gmra.mxu0 %v1270
    %v1302 = vpop.f32.mrf.mxu0
    %v1303 = vadd.f32 0.0, %v1302
    %v1304 = vpop.f32.mrf.mxu0
    %v1305 = vadd.f32 0.0, %v1304
    %1306 = vmatmul.bf16.gmra.mxu0 %v1273
    %v1307 = vpop.f32.mrf.mxu0
    %v1308 = vadd.f32 0.0, %v1307
    %v1309 = vpop.f32.mrf.mxu0
    %v1310 = vadd.f32 0.0, %v1309
    %1311 = vmatmul.bf16.gmra.mxu0 %v1276
    %v1312 = vpop.f32.mrf.mxu0
    %v1313 = vadd.f32 0.0, %v1312
    %v1314 = vpop.f32.mrf.mxu0
    %v1315 = vadd.f32 0.0, %v1314
    %1316 = vmatmul.bf16.gmra.mxu0 %v1279
    %v1317 = vpop.f32.mrf.mxu0
    %v1318 = vadd.f32 0.0, %v1317
    %v1319 = vpop.f32.mrf.mxu0
    %v1320 = vadd.f32 0.0, %v1319
    %1321 = vmatmul.bf16.gmra.mxu0 %v1282
    %v1322 = vpop.f32.mrf.mxu0
    %v1323 = vadd.f32 0.0, %v1322
    %v1324 = vpop.f32.mrf.mxu0
    %v1325 = vadd.f32 0.0, %v1324
    %1326 = vmatmul.bf16.gmra.mxu0 %v1285
    %v1327 = vpop.f32.mrf.mxu0
    %v1328 = vadd.f32 0.0, %v1327
    %v1329 = vpop.f32.mrf.mxu0
    %v1330 = vadd.f32 0.0, %v1329
    %1331 = vmatmul.bf16.gmra.mxu0 %v1288
    %v1332 = vpop.f32.mrf.mxu0
    %v1333 = vadd.f32 0.0, %v1332
    %v1334 = vpop.f32.mrf.mxu0
    %v1335 = vadd.f32 0.0, %v1334
    %1336 = vmatmul.bf16.gmra.mxu0 %v1291
    %v1337 = vpop.f32.mrf.mxu0
    %v1338 = vadd.f32 0.0, %v1337
    %v1339 = vpop.f32.mrf.mxu0
    %v1340 = vadd.f32 0.0, %v1339
    %1341 = vdwg.mxu0
    %v1342 = vadd.f32 %v171, %v1303
    %v1343 = vadd.f32 %v172, %v1305
    %v1344 = vadd.f32 %v173, %v1308
    %v1345 = vadd.f32 %v174, %v1310
    %v1346 = vadd.f32 %v175, %v1313
    %v1347 = vadd.f32 %v176, %v1315
    %v1348 = vadd.f32 %v177, %v1318
    %v1349 = vadd.f32 %v178, %v1320
    %v1350 = vadd.f32 %v179, %v1323
    %v1351 = vadd.f32 %v180, %v1325
    %v1352 = vadd.f32 %v181, %v1328
    %v1353 = vadd.f32 %v182, %v1330
    %v1354 = vadd.f32 %v183, %v1333
    %v1355 = vadd.f32 %v184, %v1335
    %v1356 = vadd.f32 %v185, %v1338
    %v1357 = vadd.f32 %v186, %v1340
    %v1358 = vmul.f32 %v1342, %v1342
    %v1359 = vmul.f32 %v1343, %v1343
    %v1360 = vmul.f32 %v1344, %v1344
    %v1361 = vmul.f32 %v1345, %v1345
    %v1362 = vmul.f32 %v1346, %v1346
    %v1363 = vmul.f32 %v1347, %v1347
    %v1364 = vmul.f32 %v1348, %v1348
    %v1365 = vmul.f32 %v1349, %v1349
    %v1366 = vmul.f32 %v1350, %v1350
    %v1367 = vmul.f32 %v1351, %v1351
    %v1368 = vmul.f32 %v1352, %v1352
    %v1369 = vmul.f32 %v1353, %v1353
    %v1370 = vmul.f32 %v1354, %v1354
    %v1371 = vmul.f32 %v1355, %v1355
    %v1372 = vmul.f32 %v1356, %v1356
    %v1373 = vmul.f32 %v1357, %v1357
    %v1374 = vsel %vm203, %v1358, 0.0
    %1375 = vadd.xlane.f32.xlu0 %v1374
    %v1376 = vpop.xlane.xlu0 %1375
    %v1377 = vsel %vm203, %v1359, 0.0
    %1378 = vadd.xlane.f32.xlu0 %v1377
    %v1379 = vpop.xlane.xlu0 %1378
    %v1380 = vsel %vm203, %v1360, 0.0
    %1381 = vadd.xlane.f32.xlu0 %v1380
    %v1382 = vpop.xlane.xlu0 %1381
    %v1383 = vsel %vm203, %v1361, 0.0
    %1384 = vadd.xlane.f32.xlu0 %v1383
    %v1385 = vpop.xlane.xlu0 %1384
    %v1386 = vsel %vm203, %v1362, 0.0
    %1387 = vadd.xlane.f32.xlu0 %v1386
    %v1388 = vpop.xlane.xlu0 %1387
    %v1389 = vsel %vm203, %v1363, 0.0
    %1390 = vadd.xlane.f32.xlu0 %v1389
    %v1391 = vpop.xlane.xlu0 %1390
    %v1392 = vsel %vm203, %v1364, 0.0
    %1393 = vadd.xlane.f32.xlu0 %v1392
    %v1394 = vpop.xlane.xlu0 %1393
    %v1395 = vsel %vm203, %v1365, 0.0
    %1396 = vadd.xlane.f32.xlu0 %v1395
    %v1397 = vpop.xlane.xlu0 %1396
    %v1398 = vsel %vm203, %v1366, 0.0
    %1399 = vadd.xlane.f32.xlu0 %v1398
    %v1400 = vpop.xlane.xlu0 %1399
    %v1401 = vsel %vm203, %v1367, 0.0
    %1402 = vadd.xlane.f32.xlu0 %v1401
    %v1403 = vpop.xlane.xlu0 %1402
    %v1404 = vsel %vm203, %v1368, 0.0
    %1405 = vadd.xlane.f32.xlu0 %v1404
    %v1406 = vpop.xlane.xlu0 %1405
    %v1407 = vsel %vm203, %v1369, 0.0
    %1408 = vadd.xlane.f32.xlu0 %v1407
    %v1409 = vpop.xlane.xlu0 %1408
    %v1410 = vsel %vm203, %v1370, 0.0
    %1411 = vadd.xlane.f32.xlu0 %v1410
    %v1412 = vpop.xlane.xlu0 %1411
    %v1413 = vsel %vm203, %v1371, 0.0
    %1414 = vadd.xlane.f32.xlu0 %v1413
    %v1415 = vpop.xlane.xlu0 %1414
    %v1416 = vsel %vm203, %v1372, 0.0
    %1417 = vadd.xlane.f32.xlu0 %v1416
    %v1418 = vpop.xlane.xlu0 %1417
    %v1419 = vsel %vm203, %v1373, 0.0
    %1420 = vadd.xlane.f32.xlu0 %v1419
    %v1421 = vpop.xlane.xlu0 %1420
    %v1422 = vmul.f32 %v1376, %v258
    %v1423 = vmul.f32 %v1379, %v258
    %v1424 = vmul.f32 %v1382, %v258
    %v1425 = vmul.f32 %v1385, %v258
    %v1426 = vmul.f32 %v1388, %v258
    %v1427 = vmul.f32 %v1391, %v258
    %v1428 = vmul.f32 %v1394, %v258
    %v1429 = vmul.f32 %v1397, %v258
    %v1430 = vmul.f32 %v1400, %v258
    %v1431 = vmul.f32 %v1403, %v258
    %v1432 = vmul.f32 %v1406, %v258
    %v1433 = vmul.f32 %v1409, %v258
    %v1434 = vmul.f32 %v1412, %v258
    %v1435 = vmul.f32 %v1415, %v258
    %v1436 = vmul.f32 %v1418, %v258
    %v1437 = vmul.f32 %v1421, %v258
    %v1438 = vadd.f32 %v1422, 1e-06
    %v1439 = vadd.f32 %v1423, 1e-06
    %v1440 = vadd.f32 %v1424, 1e-06
    %v1441 = vadd.f32 %v1425, 1e-06
    %v1442 = vadd.f32 %v1426, 1e-06
    %v1443 = vadd.f32 %v1427, 1e-06
    %v1444 = vadd.f32 %v1428, 1e-06
    %v1445 = vadd.f32 %v1429, 1e-06
    %v1446 = vadd.f32 %v1430, 1e-06
    %v1447 = vadd.f32 %v1431, 1e-06
    %v1448 = vadd.f32 %v1432, 1e-06
    %v1449 = vadd.f32 %v1433, 1e-06
    %v1450 = vadd.f32 %v1434, 1e-06
    %v1451 = vadd.f32 %v1435, 1e-06
    %v1452 = vadd.f32 %v1436, 1e-06
    %v1453 = vadd.f32 %v1437, 1e-06
    %v1454 = vrsqrt.pop %v1438
    %v1455 = vmul.f32 %v1454, %v1438
    %v1456 = vmul.f32 %v1455, %v1454
    %v1457 = vmul.f32 0.5, %v1456
    %v1458 = vsub.f32 1.5, %v1457
    %v1459 = vmul.f32 %v1454, %v1458
    %vm1460 = vweird.f32 %v1438
    %vm1461 = vweird.f32 %v1454
    %vm1462 = vmor %vm1460, %vm1461
    %v1463 = vsel %vm1462, %v1454, %v1459
    %v1464 = vrsqrt.pop %v1439
    %v1465 = vmul.f32 %v1464, %v1439
    %v1466 = vmul.f32 %v1465, %v1464
    %v1467 = vmul.f32 0.5, %v1466
    %v1468 = vsub.f32 1.5, %v1467
    %v1469 = vmul.f32 %v1464, %v1468
    %vm1470 = vweird.f32 %v1439
    %vm1471 = vweird.f32 %v1464
    %vm1472 = vmor %vm1470, %vm1471
    %v1473 = vsel %vm1472, %v1464, %v1469
    %v1474 = vrsqrt.pop %v1440
    %v1475 = vmul.f32 %v1474, %v1440
    %v1476 = vmul.f32 %v1475, %v1474
    %v1477 = vmul.f32 0.5, %v1476
    %v1478 = vsub.f32 1.5, %v1477
    %v1479 = vmul.f32 %v1474, %v1478
    %vm1480 = vweird.f32 %v1440
    %vm1481 = vweird.f32 %v1474
    %vm1482 = vmor %vm1480, %vm1481
    %v1483 = vsel %vm1482, %v1474, %v1479
    %v1484 = vrsqrt.pop %v1441
    %v1485 = vmul.f32 %v1484, %v1441
    %v1486 = vmul.f32 %v1485, %v1484
    %v1487 = vmul.f32 0.5, %v1486
    %v1488 = vsub.f32 1.5, %v1487
    %v1489 = vmul.f32 %v1484, %v1488
    %vm1490 = vweird.f32 %v1441
    %vm1491 = vweird.f32 %v1484
    %vm1492 = vmor %vm1490, %vm1491
    %v1493 = vsel %vm1492, %v1484, %v1489
    %v1494 = vrsqrt.pop %v1442
    %v1495 = vmul.f32 %v1494, %v1442
    %v1496 = vmul.f32 %v1495, %v1494
    %v1497 = vmul.f32 0.5, %v1496
    %v1498 = vsub.f32 1.5, %v1497
    %v1499 = vmul.f32 %v1494, %v1498
    %vm1500 = vweird.f32 %v1442
    %vm1501 = vweird.f32 %v1494
    %vm1502 = vmor %vm1500, %vm1501
    %v1503 = vsel %vm1502, %v1494, %v1499
    %v1504 = vrsqrt.pop %v1443
    %v1505 = vmul.f32 %v1504, %v1443
    %v1506 = vmul.f32 %v1505, %v1504
    %v1507 = vmul.f32 0.5, %v1506
    %v1508 = vsub.f32 1.5, %v1507
    %v1509 = vmul.f32 %v1504, %v1508
    %vm1510 = vweird.f32 %v1443
    %vm1511 = vweird.f32 %v1504
    %vm1512 = vmor %vm1510, %vm1511
    %v1513 = vsel %vm1512, %v1504, %v1509
    %v1514 = vrsqrt.pop %v1444
    %v1515 = vmul.f32 %v1514, %v1444
    %v1516 = vmul.f32 %v1515, %v1514
    %v1517 = vmul.f32 0.5, %v1516
    %v1518 = vsub.f32 1.5, %v1517
    %v1519 = vmul.f32 %v1514, %v1518
    %vm1520 = vweird.f32 %v1444
    %vm1521 = vweird.f32 %v1514
    %vm1522 = vmor %vm1520, %vm1521
    %v1523 = vsel %vm1522, %v1514, %v1519
    %v1524 = vrsqrt.pop %v1445
    %v1525 = vmul.f32 %v1524, %v1445
    %v1526 = vmul.f32 %v1525, %v1524
    %v1527 = vmul.f32 0.5, %v1526
    %v1528 = vsub.f32 1.5, %v1527
    %v1529 = vmul.f32 %v1524, %v1528
    %vm1530 = vweird.f32 %v1445
    %vm1531 = vweird.f32 %v1524
    %vm1532 = vmor %vm1530, %vm1531
    %v1533 = vsel %vm1532, %v1524, %v1529
    %v1534 = vrsqrt.pop %v1446
    %v1535 = vmul.f32 %v1534, %v1446
    %v1536 = vmul.f32 %v1535, %v1534
    %v1537 = vmul.f32 0.5, %v1536
    %v1538 = vsub.f32 1.5, %v1537
    %v1539 = vmul.f32 %v1534, %v1538
    %vm1540 = vweird.f32 %v1446
    %vm1541 = vweird.f32 %v1534
    %vm1542 = vmor %vm1540, %vm1541
    %v1543 = vsel %vm1542, %v1534, %v1539
    %v1544 = vrsqrt.pop %v1447
    %v1545 = vmul.f32 %v1544, %v1447
    %v1546 = vmul.f32 %v1545, %v1544
    %v1547 = vmul.f32 0.5, %v1546
    %v1548 = vsub.f32 1.5, %v1547
    %v1549 = vmul.f32 %v1544, %v1548
    %vm1550 = vweird.f32 %v1447
    %vm1551 = vweird.f32 %v1544
    %vm1552 = vmor %vm1550, %vm1551
    %v1553 = vsel %vm1552, %v1544, %v1549
    %v1554 = vrsqrt.pop %v1448
    %v1555 = vmul.f32 %v1554, %v1448
    %v1556 = vmul.f32 %v1555, %v1554
    %v1557 = vmul.f32 0.5, %v1556
    %v1558 = vsub.f32 1.5, %v1557
    %v1559 = vmul.f32 %v1554, %v1558
    %vm1560 = vweird.f32 %v1448
    %vm1561 = vweird.f32 %v1554
    %vm1562 = vmor %vm1560, %vm1561
    %v1563 = vsel %vm1562, %v1554, %v1559
    %v1564 = vrsqrt.pop %v1449
    %v1565 = vmul.f32 %v1564, %v1449
    %v1566 = vmul.f32 %v1565, %v1564
    %v1567 = vmul.f32 0.5, %v1566
    %v1568 = vsub.f32 1.5, %v1567
    %v1569 = vmul.f32 %v1564, %v1568
    %vm1570 = vweird.f32 %v1449
    %vm1571 = vweird.f32 %v1564
    %vm1572 = vmor %vm1570, %vm1571
    %v1573 = vsel %vm1572, %v1564, %v1569
    %v1574 = vrsqrt.pop %v1450
    %v1575 = vmul.f32 %v1574, %v1450
    %v1576 = vmul.f32 %v1575, %v1574
    %v1577 = vmul.f32 0.5, %v1576
    %v1578 = vsub.f32 1.5, %v1577
    %v1579 = vmul.f32 %v1574, %v1578
    %vm1580 = vweird.f32 %v1450
    %vm1581 = vweird.f32 %v1574
    %vm1582 = vmor %vm1580, %vm1581
    %v1583 = vsel %vm1582, %v1574, %v1579
    %v1584 = vrsqrt.pop %v1451
    %v1585 = vmul.f32 %v1584, %v1451
    %v1586 = vmul.f32 %v1585, %v1584
    %v1587 = vmul.f32 0.5, %v1586
    %v1588 = vsub.f32 1.5, %v1587
    %v1589 = vmul.f32 %v1584, %v1588
    %vm1590 = vweird.f32 %v1451
    %vm1591 = vweird.f32 %v1584
    %vm1592 = vmor %vm1590, %vm1591
    %v1593 = vsel %vm1592, %v1584, %v1589
    %v1594 = vrsqrt.pop %v1452
    %v1595 = vmul.f32 %v1594, %v1452
    %v1596 = vmul.f32 %v1595, %v1594
    %v1597 = vmul.f32 0.5, %v1596
    %v1598 = vsub.f32 1.5, %v1597
    %v1599 = vmul.f32 %v1594, %v1598
    %vm1600 = vweird.f32 %v1452
    %vm1601 = vweird.f32 %v1594
    %vm1602 = vmor %vm1600, %vm1601
    %v1603 = vsel %vm1602, %v1594, %v1599
    %v1604 = vrsqrt.pop %v1453
    %v1605 = vmul.f32 %v1604, %v1453
    %v1606 = vmul.f32 %v1605, %v1604
    %v1607 = vmul.f32 0.5, %v1606
    %v1608 = vsub.f32 1.5, %v1607
    %v1609 = vmul.f32 %v1604, %v1608
    %vm1610 = vweird.f32 %v1453
    %vm1611 = vweird.f32 %v1604
    %vm1612 = vmor %vm1610, %vm1611
    %v1613 = vsel %vm1612, %v1604, %v1609
    %v1614 = vmul.f32 %v1342, %v1463
    %v1615 = vmul.f32 %v1343, %v1473
    %v1616 = vmul.f32 %v1344, %v1483
    %v1617 = vmul.f32 %v1345, %v1493
    %v1618 = vmul.f32 %v1346, %v1503
    %v1619 = vmul.f32 %v1347, %v1513
    %v1620 = vmul.f32 %v1348, %v1523
    %v1621 = vmul.f32 %v1349, %v1533
    %v1622 = vmul.f32 %v1350, %v1543
    %v1623 = vmul.f32 %v1351, %v1553
    %v1624 = vmul.f32 %v1352, %v1563
    %v1625 = vmul.f32 %v1353, %v1573
    %v1626 = vmul.f32 %v1354, %v1583
    %v1627 = vmul.f32 %v1355, %v1593
    %v1628 = vmul.f32 %v1356, %v1603
    %v1629 = vmul.f32 %v1357, %v1613
    %v1630 = vld [vmem:[%s7] sm:$0x1]
    %v1632 = vperm.slane %v1630, 0
    %v1634 = vmul.f32 %v1614, %v1632
    %v1635 = vmul.f32 %v1615, %v1632
    %v1636 = vmul.f32 %v1616, %v1632
    %v1637 = vmul.f32 %v1617, %v1632
    %v1638 = vmul.f32 %v1618, %v1632
    %v1639 = vmul.f32 %v1619, %v1632
    %v1640 = vmul.f32 %v1620, %v1632
    %v1641 = vmul.f32 %v1621, %v1632
    %v1642 = vmul.f32 %v1622, %v1632
    %v1643 = vmul.f32 %v1623, %v1632
    %v1644 = vmul.f32 %v1624, %v1632
    %v1645 = vmul.f32 %v1625, %v1632
    %v1646 = vmul.f32 %v1626, %v1632
    %v1647 = vmul.f32 %v1627, %v1632
    %v1648 = vmul.f32 %v1628, %v1632
    %v1649 = vmul.f32 %v1629, %v1632
    %v1650 = vpack.c.bf16 %v1635, %v1634
    %v1651 = vpack.c.bf16 %v1637, %v1636
    %v1652 = vpack.c.bf16 %v1639, %v1638
    %v1653 = vpack.c.bf16 %v1641, %v1640
    %v1654 = vpack.c.bf16 %v1643, %v1642
    %v1655 = vpack.c.bf16 %v1645, %v1644
    %v1656 = vpack.c.bf16 %v1647, %v1646
    %v1657 = vpack.c.bf16 %v1649, %v1648
    %v1658 = vld [vmem:[%s5] sm:$0xf]
    %v1659 = vld [vmem:[%s5 + $0x4] sm:$0xf]
    %v1660 = vld [vmem:[%s5 + $0x8] sm:$0xf]
    %v1661 = vld [vmem:[%s5 + $0xc] sm:$0xf]
    %v1666 = vunpack.c.l.b16 %v1658
    %v1667 = vunpack.c.l.b16 %v1659
    %v1668 = vunpack.c.l.b16 %v1660
    %v1669 = vunpack.c.l.b16 %v1661
    %v1670 = vpack.c.b16 %v1667, %v1666
    %v1671 = vpack.c.b16 %v1669, %v1668
    %v1675 = vsel %vm203, %v1650, 0
    %v1678 = vsel %vm203, %v1651, 0
    %v1681 = vsel %vm203, %v1652, 0
    %v1684 = vsel %vm203, %v1653, 0
    %v1687 = vsel %vm203, %v1654, 0
    %v1690 = vsel %vm203, %v1655, 0
    %v1693 = vsel %vm203, %v1656, 0
    %v1696 = vsel %vm203, %v1657, 0
    %1698 = vmatpush.bf16.msra.mxu0 0
    %1699 = vmatpush.bf16.msra.mxu0 0
    %1700 = vmatpush.bf16.msra.mxu0 0
    %1701 = vmatpush.bf16.msra.mxu0 0
    %1702 = vmatpush.bf16.msra.mxu0 0
    %1703 = vmatpush.bf16.msra.mxu0 0
    %1704 = vmatpush.bf16.msra.mxu0 %v1671
    %1705 = vmatpush.bf16.msra.mxu0 %v1670
    %1706 = vmatmul.bf16.gmra.mxu0 %v1675
    %v1707 = vpop.f32.mrf.mxu0
    %v1708 = vadd.f32 0.0, %v1707
    %v1709 = vpop.f32.mrf.mxu0
    %v1710 = vadd.f32 0.0, %v1709
    %1711 = vmatmul.bf16.gmra.mxu0 %v1678
    %v1712 = vpop.f32.mrf.mxu0
    %v1713 = vadd.f32 0.0, %v1712
    %v1714 = vpop.f32.mrf.mxu0
    %v1715 = vadd.f32 0.0, %v1714
    %1716 = vmatmul.bf16.gmra.mxu0 %v1681
    %v1717 = vpop.f32.mrf.mxu0
    %v1718 = vadd.f32 0.0, %v1717
    %v1719 = vpop.f32.mrf.mxu0
    %v1720 = vadd.f32 0.0, %v1719
    %1721 = vmatmul.bf16.gmra.mxu0 %v1684
    %v1722 = vpop.f32.mrf.mxu0
    %v1723 = vadd.f32 0.0, %v1722
    %v1724 = vpop.f32.mrf.mxu0
    %v1725 = vadd.f32 0.0, %v1724
    %1726 = vmatmul.bf16.gmra.mxu0 %v1687
    %v1727 = vpop.f32.mrf.mxu0
    %v1728 = vadd.f32 0.0, %v1727
    %v1729 = vpop.f32.mrf.mxu0
    %v1730 = vadd.f32 0.0, %v1729
    %1731 = vmatmul.bf16.gmra.mxu0 %v1690
    %v1732 = vpop.f32.mrf.mxu0
    %v1733 = vadd.f32 0.0, %v1732
    %v1734 = vpop.f32.mrf.mxu0
    %v1735 = vadd.f32 0.0, %v1734
    %1736 = vmatmul.bf16.gmra.mxu0 %v1693
    %v1737 = vpop.f32.mrf.mxu0
    %v1738 = vadd.f32 0.0, %v1737
    %v1739 = vpop.f32.mrf.mxu0
    %v1740 = vadd.f32 0.0, %v1739
    %1741 = vmatmul.bf16.gmra.mxu0 %v1696
    %v1742 = vpop.f32.mrf.mxu0
    %v1743 = vadd.f32 0.0, %v1742
    %v1744 = vpop.f32.mrf.mxu0
    %v1745 = vadd.f32 0.0, %v1744
    %1746 = vdwg.mxu0
    %v1747 = vmax.f32 %v1708, 0.0
    %v1748 = vmax.f32 %v1710, 0.0
    %v1749 = vmax.f32 %v1713, 0.0
    %v1750 = vmax.f32 %v1715, 0.0
    %v1751 = vmax.f32 %v1718, 0.0
    %v1752 = vmax.f32 %v1720, 0.0
    %v1753 = vmax.f32 %v1723, 0.0
    %v1754 = vmax.f32 %v1725, 0.0
    %v1755 = vmax.f32 %v1728, 0.0
    %v1756 = vmax.f32 %v1730, 0.0
    %v1757 = vmax.f32 %v1733, 0.0
    %v1758 = vmax.f32 %v1735, 0.0
    %v1759 = vmax.f32 %v1738, 0.0
    %v1760 = vmax.f32 %v1740, 0.0
    %v1761 = vmax.f32 %v1743, 0.0
    %v1762 = vmax.f32 %v1745, 0.0
    %v1763 = vpack.c.bf16 %v1748, %v1747
    %v1764 = vpack.c.bf16 %v1750, %v1749
    %v1765 = vpack.c.bf16 %v1752, %v1751
    %v1766 = vpack.c.bf16 %v1754, %v1753
    %v1767 = vpack.c.bf16 %v1756, %v1755
    %v1768 = vpack.c.bf16 %v1758, %v1757
    %v1769 = vpack.c.bf16 %v1760, %v1759
    %v1770 = vpack.c.bf16 %v1762, %v1761
    %v1771 = vld [vmem:[%s6] sm:$0xf]
    %v1772 = vld [vmem:[%s6 + $0x4] sm:$0xf]
    %v1773 = vld [vmem:[%s6 + $0x8] sm:$0xf]
    %v1774 = vld [vmem:[%s6 + $0xc] sm:$0xf]
    %v1775 = vld [vmem:[%s6 + $0x10] sm:$0xf]
    %v1776 = vld [vmem:[%s6 + $0x14] sm:$0xf]
    %v1777 = vld [vmem:[%s6 + $0x18] sm:$0xf]
    %v1778 = vld [vmem:[%s6 + $0x1c] sm:$0xf]
    %v1779 = vld [vmem:[%s6 + $0x20] sm:$0xf]
    %v1780 = vld [vmem:[%s6 + $0x24] sm:$0xf]
    %v1781 = vld [vmem:[%s6 + $0x28] sm:$0xf]
    %v1782 = vld [vmem:[%s6 + $0x2c] sm:$0xf]
    %v1783 = vld [vmem:[%s6 + $0x30] sm:$0xf]
    %v1784 = vld [vmem:[%s6 + $0x34] sm:$0xf]
    %v1785 = vld [vmem:[%s6 + $0x38] sm:$0xf]
    %v1786 = vld [vmem:[%s6 + $0x3c] sm:$0xf]
    %v1803 = vunpack.c.l.b16 %v1771
    %v1804 = vunpack.c.l.b16 %v1772
    %v1805 = vunpack.c.l.b16 %v1773
    %v1806 = vunpack.c.l.b16 %v1774
    %v1807 = vunpack.c.l.b16 %v1775
    %v1808 = vunpack.c.l.b16 %v1776
    %v1809 = vunpack.c.l.b16 %v1777
    %v1810 = vunpack.c.l.b16 %v1778
    %v1811 = vunpack.c.l.b16 %v1779
    %v1812 = vunpack.c.l.b16 %v1780
    %v1813 = vunpack.c.l.b16 %v1781
    %v1814 = vunpack.c.l.b16 %v1782
    %v1815 = vunpack.c.l.b16 %v1783
    %v1816 = vunpack.c.l.b16 %v1784
    %v1817 = vunpack.c.l.b16 %v1785
    %v1818 = vunpack.c.l.b16 %v1786
    %v1819 = vpack.c.b16 %v1804, %v1803
    %v1820 = vpack.c.b16 %v1806, %v1805
    %v1821 = vpack.c.b16 %v1808, %v1807
    %v1822 = vpack.c.b16 %v1810, %v1809
    %v1823 = vpack.c.b16 %v1812, %v1811
    %v1824 = vpack.c.b16 %v1814, %v1813
    %v1825 = vpack.c.b16 %v1816, %v1815
    %v1826 = vpack.c.b16 %v1818, %v1817
    %1835 = vmatpush.bf16.msra.mxu0 %v1826
    %1836 = vmatpush.bf16.msra.mxu0 %v1825
    %1837 = vmatpush.bf16.msra.mxu0 %v1824
    %1838 = vmatpush.bf16.msra.mxu0 %v1823
    %1839 = vmatpush.bf16.msra.mxu0 %v1822
    %1840 = vmatpush.bf16.msra.mxu0 %v1821
    %1841 = vmatpush.bf16.msra.mxu0 %v1820
    %1842 = vmatpush.bf16.msra.mxu0 %v1819
    %1843 = vmatmul.bf16.gmra.mxu0 %v1763
    %v1844 = vpop.f32.mrf.mxu0
    %v1845 = vadd.f32 0.0, %v1844
    %v1846 = vpop.f32.mrf.mxu0
    %v1847 = vadd.f32 0.0, %v1846
    %1848 = vmatmul.bf16.gmra.mxu0 %v1764
    %v1849 = vpop.f32.mrf.mxu0
    %v1850 = vadd.f32 0.0, %v1849
    %v1851 = vpop.f32.mrf.mxu0
    %v1852 = vadd.f32 0.0, %v1851
    %1853 = vmatmul.bf16.gmra.mxu0 %v1765
    %v1854 = vpop.f32.mrf.mxu0
    %v1855 = vadd.f32 0.0, %v1854
    %v1856 = vpop.f32.mrf.mxu0
    %v1857 = vadd.f32 0.0, %v1856
    %1858 = vmatmul.bf16.gmra.mxu0 %v1766
    %v1859 = vpop.f32.mrf.mxu0
    %v1860 = vadd.f32 0.0, %v1859
    %v1861 = vpop.f32.mrf.mxu0
    %v1862 = vadd.f32 0.0, %v1861
    %1863 = vmatmul.bf16.gmra.mxu0 %v1767
    %v1864 = vpop.f32.mrf.mxu0
    %v1865 = vadd.f32 0.0, %v1864
    %v1866 = vpop.f32.mrf.mxu0
    %v1867 = vadd.f32 0.0, %v1866
    %1868 = vmatmul.bf16.gmra.mxu0 %v1768
    %v1869 = vpop.f32.mrf.mxu0
    %v1870 = vadd.f32 0.0, %v1869
    %v1871 = vpop.f32.mrf.mxu0
    %v1872 = vadd.f32 0.0, %v1871
    %1873 = vmatmul.bf16.gmra.mxu0 %v1769
    %v1874 = vpop.f32.mrf.mxu0
    %v1875 = vadd.f32 0.0, %v1874
    %v1876 = vpop.f32.mrf.mxu0
    %v1877 = vadd.f32 0.0, %v1876
    %1878 = vmatmul.bf16.gmra.mxu0 %v1770
    %v1879 = vpop.f32.mrf.mxu0
    %v1880 = vadd.f32 0.0, %v1879
    %v1881 = vpop.f32.mrf.mxu0
    %v1882 = vadd.f32 0.0, %v1881
    %1883 = vdwg.mxu0
    %v1884 = vadd.f32 %v1342, %v1845
    %v1885 = vadd.f32 %v1343, %v1847
    %v1886 = vadd.f32 %v1344, %v1850
    %v1887 = vadd.f32 %v1345, %v1852
    %v1888 = vadd.f32 %v1346, %v1855
    %v1889 = vadd.f32 %v1347, %v1857
    %v1890 = vadd.f32 %v1348, %v1860
    %v1891 = vadd.f32 %v1349, %v1862
    %v1892 = vadd.f32 %v1350, %v1865
    %v1893 = vadd.f32 %v1351, %v1867
    %v1894 = vadd.f32 %v1352, %v1870
    %v1895 = vadd.f32 %v1353, %v1872
    %v1896 = vadd.f32 %v1354, %v1875
    %v1897 = vadd.f32 %v1355, %v1877
    %v1898 = vadd.f32 %v1356, %v1880
    %v1899 = vadd.f32 %v1357, %v1882
    %v1900 = vld [vmem:[%s8] sm:$0x1]
    %v1902 = vperm.slane %v1900, 0
    %v1904 = vmul.f32 %v1884, %v1902
    %v1905 = vmul.f32 %v1885, %v1902
    %v1906 = vmul.f32 %v1886, %v1902
    %v1907 = vmul.f32 %v1887, %v1902
    %v1908 = vmul.f32 %v1888, %v1902
    %v1909 = vmul.f32 %v1889, %v1902
    %v1910 = vmul.f32 %v1890, %v1902
    %v1911 = vmul.f32 %v1891, %v1902
    %v1912 = vmul.f32 %v1892, %v1902
    %v1913 = vmul.f32 %v1893, %v1902
    %v1914 = vmul.f32 %v1894, %v1902
    %v1915 = vmul.f32 %v1895, %v1902
    %v1916 = vmul.f32 %v1896, %v1902
    %v1917 = vmul.f32 %v1897, %v1902
    %v1918 = vmul.f32 %v1898, %v1902
    %v1919 = vmul.f32 %v1899, %v1902
    %v1920 = vsel %vm203, %v1904, 0.0
    %1921 = vadd.xlane.f32.xlu0 %v1920
    %v1922 = vpop.xlane.xlu0 %1921
    %v1923 = vsel %vm203, %v1905, 0.0
    %1924 = vadd.xlane.f32.xlu0 %v1923
    %v1925 = vpop.xlane.xlu0 %1924
    %v1926 = vsel %vm203, %v1906, 0.0
    %1927 = vadd.xlane.f32.xlu0 %v1926
    %v1928 = vpop.xlane.xlu0 %1927
    %v1929 = vsel %vm203, %v1907, 0.0
    %1930 = vadd.xlane.f32.xlu0 %v1929
    %v1931 = vpop.xlane.xlu0 %1930
    %v1932 = vsel %vm203, %v1908, 0.0
    %1933 = vadd.xlane.f32.xlu0 %v1932
    %v1934 = vpop.xlane.xlu0 %1933
    %v1935 = vsel %vm203, %v1909, 0.0
    %1936 = vadd.xlane.f32.xlu0 %v1935
    %v1937 = vpop.xlane.xlu0 %1936
    %v1938 = vsel %vm203, %v1910, 0.0
    %1939 = vadd.xlane.f32.xlu0 %v1938
    %v1940 = vpop.xlane.xlu0 %1939
    %v1941 = vsel %vm203, %v1911, 0.0
    %1942 = vadd.xlane.f32.xlu0 %v1941
    %v1943 = vpop.xlane.xlu0 %1942
    %v1944 = vsel %vm203, %v1912, 0.0
    %1945 = vadd.xlane.f32.xlu0 %v1944
    %v1946 = vpop.xlane.xlu0 %1945
    %v1947 = vsel %vm203, %v1913, 0.0
    %1948 = vadd.xlane.f32.xlu0 %v1947
    %v1949 = vpop.xlane.xlu0 %1948
    %v1950 = vsel %vm203, %v1914, 0.0
    %1951 = vadd.xlane.f32.xlu0 %v1950
    %v1952 = vpop.xlane.xlu0 %1951
    %v1953 = vsel %vm203, %v1915, 0.0
    %1954 = vadd.xlane.f32.xlu0 %v1953
    %v1955 = vpop.xlane.xlu0 %1954
    %v1956 = vsel %vm203, %v1916, 0.0
    %1957 = vadd.xlane.f32.xlu0 %v1956
    %v1958 = vpop.xlane.xlu0 %1957
    %v1959 = vsel %vm203, %v1917, 0.0
    %1960 = vadd.xlane.f32.xlu0 %v1959
    %v1961 = vpop.xlane.xlu0 %1960
    %v1962 = vsel %vm203, %v1918, 0.0
    %1963 = vadd.xlane.f32.xlu0 %v1962
    %v1964 = vpop.xlane.xlu0 %1963
    %v1965 = vsel %vm203, %v1919, 0.0
    %1966 = vadd.xlane.f32.xlu0 %v1965
    %v1967 = vpop.xlane.xlu0 %1966
    %v1984 = vperm.slane %v1922, %v833
    %v1985 = vadd.s32 %v833, 4294967288
    %v1986 = vperm.slane %v1925, %v1985
    %vm1987 = vcmask 130112
    %v1988 = vsel %vm1987, %v1986, %v1984
    %v1989 = vperm.slane %v1928, %v833
    %v1990 = vperm.slane %v1931, %v1985
    %v1991 = vsel %vm1987, %v1990, %v1989
    %v1992 = vperm.slane %v1934, %v833
    %v1993 = vperm.slane %v1937, %v1985
    %v1994 = vsel %vm1987, %v1993, %v1992
    %v1995 = vperm.slane %v1940, %v833
    %v1996 = vperm.slane %v1943, %v1985
    %v1997 = vsel %vm1987, %v1996, %v1995
    %v1998 = vperm.slane %v1946, %v833
    %v1999 = vperm.slane %v1949, %v1985
    %v2000 = vsel %vm1987, %v1999, %v1998
    %v2001 = vperm.slane %v1952, %v833
    %v2002 = vperm.slane %v1955, %v1985
    %v2003 = vsel %vm1987, %v2002, %v2001
    %v2004 = vperm.slane %v1958, %v833
    %v2005 = vperm.slane %v1961, %v1985
    %v2006 = vsel %vm1987, %v2005, %v2004
    %v2007 = vperm.slane %v1964, %v833
    %v2008 = vperm.slane %v1967, %v1985
    %v2009 = vsel %vm1987, %v2008, %v2007
    %vm2010 = vcmask 1041409
    %v2011 = vsel %vm2010, %v1991, %v1988
    %vm2012 = vcmask 1042434
    %v2013 = vsel %vm2012, %v1994, %v2011
    %vm2014 = vcmask 1043459
    %v2015 = vsel %vm2014, %v1997, %v2013
    %vm2016 = vcmask 1044484
    %v2017 = vsel %vm2016, %v2000, %v2015
    %vm2018 = vcmask 1045509
    %v2019 = vsel %vm2018, %v2003, %v2017
    %vm2020 = vcmask 1046534
    %v2021 = vsel %vm2020, %v2006, %v2019
    %vm2022 = vcmask 1047559
    %v2023 = vsel %vm2022, %v2009, %v2021
    %2025 = vst.msk [vmem:[#allocation2] sm:$0xff] %vm42, %v2023
    %v2026 = vlaneseq
    %v2027 = vshrl.u32 %v2026, 7
    %v2028 = vadd.s32 %v2027, 8
    %vm2029 = vcmp.lt.s32.totalorder %v2027, 16
    %vm2030 = vcmp.lt.s32.totalorder %v2028, 16
    %v2031 = vsel %vm2029, 1, 0
    %v2032 = vsel %vm2030, 1, 0
    %v2033 = vcvt.s32.f32 %v2031
    %v2034 = vcvt.s32.f32 %v2032
    %v2035 = vmul.f32 %v1884, %v2033
    %v2036 = vmul.f32 %v1885, %v2034
    %v2037 = vmul.f32 %v1886, %v2033
    %v2038 = vmul.f32 %v1887, %v2034
    %v2039 = vmul.f32 %v1888, %v2033
    %v2040 = vmul.f32 %v1889, %v2034
    %v2041 = vmul.f32 %v1890, %v2033
    %v2042 = vmul.f32 %v1891, %v2034
    %v2043 = vmul.f32 %v1892, %v2033
    %v2044 = vmul.f32 %v1893, %v2034
    %v2045 = vmul.f32 %v1894, %v2033
    %v2046 = vmul.f32 %v1895, %v2034
    %v2047 = vmul.f32 %v1896, %v2033
    %v2048 = vmul.f32 %v1897, %v2034
    %v2049 = vmul.f32 %v1898, %v2033
    %v2050 = vmul.f32 %v1899, %v2034
    %v2051 = vsel %vm203, %v2035, 0.0
    %v2052 = vsel %vm203, %v2036, 0.0
    %v2053 = vadd.f32 %v2051, %v2052
    %v2054 = vrot.slane %v2053, 4
    %v2055 = vadd.f32 %v2053, %v2054
    %v2056 = vrot.slane %v2055, 2
    %v2057 = vadd.f32 %v2055, %v2056
    %v2058 = vrot.slane %v2057, 1
    %v2059 = vadd.f32 %v2057, %v2058
    %v2060 = vsel %vm203, %v2037, 0.0
    %v2061 = vsel %vm203, %v2038, 0.0
    %v2062 = vadd.f32 %v2060, %v2061
    %v2063 = vrot.slane %v2062, 4
    %v2064 = vadd.f32 %v2062, %v2063
    %v2065 = vrot.slane %v2064, 2
    %v2066 = vadd.f32 %v2064, %v2065
    %v2067 = vrot.slane %v2066, 1
    %v2068 = vadd.f32 %v2066, %v2067
    %v2069 = vsel %vm203, %v2039, 0.0
    %v2070 = vsel %vm203, %v2040, 0.0
    %v2071 = vadd.f32 %v2069, %v2070
    %v2072 = vrot.slane %v2071, 4
    %v2073 = vadd.f32 %v2071, %v2072
    %v2074 = vrot.slane %v2073, 2
    %v2075 = vadd.f32 %v2073, %v2074
    %v2076 = vrot.slane %v2075, 1
    %v2077 = vadd.f32 %v2075, %v2076
    %v2078 = vsel %vm203, %v2041, 0.0
    %v2079 = vsel %vm203, %v2042, 0.0
    %v2080 = vadd.f32 %v2078, %v2079
    %v2081 = vrot.slane %v2080, 4
    %v2082 = vadd.f32 %v2080, %v2081
    %v2083 = vrot.slane %v2082, 2
    %v2084 = vadd.f32 %v2082, %v2083
    %v2085 = vrot.slane %v2084, 1
    %v2086 = vadd.f32 %v2084, %v2085
    %v2087 = vsel %vm203, %v2043, 0.0
    %v2088 = vsel %vm203, %v2044, 0.0
    %v2089 = vadd.f32 %v2087, %v2088
    %v2090 = vrot.slane %v2089, 4
    %v2091 = vadd.f32 %v2089, %v2090
    %v2092 = vrot.slane %v2091, 2
    %v2093 = vadd.f32 %v2091, %v2092
    %v2094 = vrot.slane %v2093, 1
    %v2095 = vadd.f32 %v2093, %v2094
    %v2096 = vsel %vm203, %v2045, 0.0
    %v2097 = vsel %vm203, %v2046, 0.0
    %v2098 = vadd.f32 %v2096, %v2097
    %v2099 = vrot.slane %v2098, 4
    %v2100 = vadd.f32 %v2098, %v2099
    %v2101 = vrot.slane %v2100, 2
    %v2102 = vadd.f32 %v2100, %v2101
    %v2103 = vrot.slane %v2102, 1
    %v2104 = vadd.f32 %v2102, %v2103
    %v2105 = vsel %vm203, %v2047, 0.0
    %v2106 = vsel %vm203, %v2048, 0.0
    %v2107 = vadd.f32 %v2105, %v2106
    %v2108 = vrot.slane %v2107, 4
    %v2109 = vadd.f32 %v2107, %v2108
    %v2110 = vrot.slane %v2109, 2
    %v2111 = vadd.f32 %v2109, %v2110
    %v2112 = vrot.slane %v2111, 1
    %v2113 = vadd.f32 %v2111, %v2112
    %v2114 = vsel %vm203, %v2049, 0.0
    %v2115 = vsel %vm203, %v2050, 0.0
    %v2116 = vadd.f32 %v2114, %v2115
    %v2117 = vrot.slane %v2116, 4
    %v2118 = vadd.f32 %v2116, %v2117
    %v2119 = vrot.slane %v2118, 2
    %v2120 = vadd.f32 %v2118, %v2119
    %v2121 = vrot.slane %v2120, 1
    %v2122 = vadd.f32 %v2120, %v2121
    %v2123 = vmul.f32 %v2059, 0.0625
    %v2124 = vmul.f32 %v2068, 0.0625
    %v2125 = vmul.f32 %v2077, 0.0625
    %v2126 = vmul.f32 %v2086, 0.0625
    %v2127 = vmul.f32 %v2095, 0.0625
    %v2128 = vmul.f32 %v2104, 0.0625
    %v2129 = vmul.f32 %v2113, 0.0625
    %v2130 = vmul.f32 %v2122, 0.0625
    %v2131 = vpack.c.bf16 %v2123, %v2123
    %v2132 = vpack.c.bf16 %v2124, %v2124
    %v2133 = vpack.c.bf16 %v2125, %v2125
    %v2134 = vpack.c.bf16 %v2126, %v2126
    %v2135 = vpack.c.bf16 %v2127, %v2127
    %v2136 = vpack.c.bf16 %v2128, %v2128
    %v2137 = vpack.c.bf16 %v2129, %v2129
    %v2138 = vpack.c.bf16 %v2130, %v2130
    %v2139 = vld [vmem:[%s9] sm:$0xf]
    %v2140 = vld [vmem:[%s9 + $0x4] sm:$0xf]
    %v2141 = vld [vmem:[%s9 + $0x8] sm:$0xf]
    %v2142 = vld [vmem:[%s9 + $0xc] sm:$0xf]
    %v2151 = vunpack.c.l.b16 %v2131
    %v2152 = vunpack.c.l.b16 %v2132
    %v2153 = vunpack.c.l.b16 %v2133
    %v2154 = vunpack.c.l.b16 %v2134
    %v2155 = vunpack.c.l.b16 %v2135
    %v2156 = vunpack.c.l.b16 %v2136
    %v2157 = vunpack.c.l.b16 %v2137
    %v2158 = vunpack.c.l.b16 %v2138
    %v2159 = vsel %vm2010, %v2152, %v2151
    %v2160 = vsel %vm2012, %v2153, %v2159
    %v2161 = vsel %vm2014, %v2154, %v2160
    %v2162 = vsel %vm2016, %v2155, %v2161
    %v2163 = vsel %vm2018, %v2156, %v2162
    %v2164 = vsel %vm2020, %v2157, %v2163
    %v2165 = vsel %vm2022, %v2158, %v2164
    %v2166 = vpack.c.b16 %v2165, %v2165
    %v2171 = vunpack.c.l.b16 %v2139
    %v2172 = vunpack.c.l.b16 %v2140
    %v2173 = vunpack.c.l.b16 %v2141
    %v2174 = vunpack.c.l.b16 %v2142
    %v2175 = vpack.c.b16 %v2172, %v2171
    %v2176 = vpack.c.b16 %v2174, %v2173
    %v2180 = vsel %vm203, %v2166, 0
    %2182 = vmatpush.bf16.msra.mxu0 0
    %2183 = vmatpush.bf16.msra.mxu0 0
    %2184 = vmatpush.bf16.msra.mxu0 0
    %2185 = vmatpush.bf16.msra.mxu0 0
    %2186 = vmatpush.bf16.msra.mxu0 0
    %2187 = vmatpush.bf16.msra.mxu0 0
    %2188 = vmatpush.bf16.msra.mxu0 %v2176
    %2189 = vmatpush.bf16.msra.mxu0 %v2175
    %2190 = vmatmul.bf16.gmra.mxu0 %v2180
    %v2191 = vpop.f32.mrf.mxu0
    %v2192 = vadd.f32 0.0, %v2191
    %v2193 = vpop.f32.mrf.mxu0
    %2194 = vdwg.mxu0
    %v2195 = vmul.f32 %v2192, %v47
    %2196 = vst [vmem:[#allocation4] sm:$0xff] %v2195
    // Predicated region
    $region42: #{tpu_custom_call.1} parent=1 // pred_check
      _
    $region43: #{tpu_custom_call.1} parent=1 // pred_check_branch
      %2198 = sbr.rel (0) target = $region45
    $region44: #{tpu_custom_call.1} parent=1 // pred_region
      %2200 = vsyncadd [#allocation3], 0
      %s2202 = sshll.u32 [#allocation2], 4
      %s2203 = int_to_ptr.vmem [resolvable:$true] %s2202
      %s2204 = sshll.u32 %s10, 4
      %s2205 = int_to_ptr.hbm [resolvable:$true] %s2204
      %2207 = dma.vmem_to_hbm [thread:$0]  %s2203, 128, %s2205, [#allocation3]
    $region45: #{tpu_custom_call.1} parent=1 // pred_fallthru
      _
    // Predicated region
    $region46: #{tpu_custom_call.1} parent=1 // pred_check
      _
    $region47: #{tpu_custom_call.1} parent=1 // pred_check_branch
      %2209 = sbr.rel (0) target = $region49
    $region48: #{tpu_custom_call.1} parent=1 // pred_region
      %2211 = vsyncadd [#allocation5], 0
      %s2213 = sshll.u32 [#allocation4], 4
      %s2214 = int_to_ptr.vmem [resolvable:$true] %s2213
      %s2215 = sshll.u32 %s11, 4
      %s2216 = int_to_ptr.hbm [resolvable:$true] %s2215
      %2218 = dma.vmem_to_hbm [thread:$0]  %s2214, 128, %s2216, [#allocation5]
    $region49: #{tpu_custom_call.1} parent=1 // pred_fallthru
      _
    // Predicated region
    $region50: #{tpu_custom_call.1} parent=1 // pred_check
      _
    $region51: #{tpu_custom_call.1} parent=1 // pred_check_branch
      %2220 = sbr.rel (0) target = $region53
    $region52: #{tpu_custom_call.1} parent=1 // pred_region
      %2222 = dma.done [#allocation3], 128
    $region53: #{tpu_custom_call.1} parent=1 // pred_fallthru
      _
    // Predicated region
    $region54: #{tpu_custom_call.1} parent=1 // pred_check
      _
    $region55: #{tpu_custom_call.1} parent=1 // pred_check_branch
      %2224 = sbr.rel (0) target = $region57
    $region56: #{tpu_custom_call.1} parent=1 // pred_region
      %2226 = dma.done [#allocation5], 128
    $region57: #{tpu_custom_call.1} parent=1 // pred_fallthru
      _
    %2227 = vsyncpa [#allocation3], 1
    %2228 = vsyncpa [#allocation5], 1

</llo_original>
